<compile_context>
chip_gen: v7x
topology: tpu7x:2x2x1
jax: 0.10.0
libtpu: 0.0.40
codegen_flags: <defaults>
</compile_context>

<pallas_src>
import math

import jax
import jax.numpy as jnp
from jax.experimental import pallas as pl
from jax.experimental.pallas import tpu as pltpu

# --- module hyper-parameters (PyTorch defaults) -------------------------------
N_POSES = 21
POSE_DIM = 6
IN_DIM = N_POSES * POSE_DIM          # 126
HIDDEN = 64
EMBED = 32
N_BLOCKS = 2
GSIZE = 2                            # GroupNorm(32, 64) -> 2 channels / group
GN_EPS = 1e-5
FOURIER_SCALE = 16.0

HP = 128                             # padded (permuted) hidden lane width
PAD_IN = 128                         # input 126 -> 128 contraction pad
PAD_OUT = 128                        # output 126 -> 128 lane-dense pad
N_LAYERS = 1 + 2 * N_BLOCKS          # pre + dense1/dense2 per block = 5

# vec slab row layout  [VEC_ROWS, 128]
_BIAS0 = 0                    # rows 0..4   combined (x-path + temb-path) dense bias
_GAMMA0 = N_LAYERS            # rows 5..9   GroupNorm gamma
_BETA0 = 2 * N_LAYERS         # rows 10..14 GroupNorm beta
_BST = 3 * N_LAYERS           # row 15      shared_time_embed bias (lanes :32)
_BPOST = 3 * N_LAYERS + 1     # row 16      post_dense bias
VEC_ROWS = 3 * N_LAYERS + 2


def _act(x):
    # swish / SiLU  (get_act(model_config) with nonlinearity='swish')
    return x * jax.nn.sigmoid(x)


def _gn_pair(h, gamma, beta):
    """GroupNorm with 2 channels per group on the permuted 128-lane hidden slab.

    The channel layout puts the two members of each group exactly HP//2 lanes
    apart, so the group partner is one XLU lane rotation (no MXU, no selects).
    """
    p = pltpu.roll(h, shift=HP // 2, axis=1)      # partner channel of every lane
    d = (h - p) * 0.5                             # h - group mean
    hn = d * jax.lax.rsqrt(d * d + GN_EPS)        # (h - mean) / sqrt(var + eps)
    return hn * gamma + beta


def timefc_kernel(x_ref, temb_f_ref, sigma_ref, w_st_ref, w_tall_ref,
                  w_main_ref, vec_ref, out_ref):
    x = x_ref[...]                                # [B, 128]
    temb_f = temb_f_ref[...]                      # [B, 32]

    # shared_time_embed = Linear(32, 32) + swish
    b_st = vec_ref[_BST:_BST + 1, :][:, :EMBED]   # [1, 32]
    temb = _act(jnp.dot(temb_f, w_st_ref[...],
                        preferred_element_type=jnp.float32) + b_st)

    # All 5 loop-invariant time-conditioning projections fused into one
    # lane-dense [B,32] x [32, 5*128] matmul; sliced per layer below.
    tproj = jnp.dot(temb, w_tall_ref[...], preferred_element_type=jnp.float32)

    def dense_gn_act(h_in, l):
        pre = (jnp.dot(h_in, w_main_ref[l], preferred_element_type=jnp.float32)
               + tproj[:, l * HP:(l + 1) * HP]
               + vec_ref[_BIAS0 + l:_BIAS0 + l + 1, :])
        gamma = vec_ref[_GAMMA0 + l:_GAMMA0 + l + 1, :]
        beta = vec_ref[_BETA0 + l:_BETA0 + l + 1, :]
        # dropout(p) is identity in eval mode
        return _act(_gn_pair(pre, gamma, beta))

    # pre_dense(+pre_dense_t) -> pre_gnorm -> act
    h = dense_gn_act(x, 0)

    # residual blocks (static count -> fully unrolled)
    for blk in range(N_BLOCKS):
        h1 = dense_gn_act(h, 1 + 2 * blk)
        h2 = dense_gn_act(h1, 2 + 2 * blk)
        h = h + h2

    res = (jnp.dot(h, w_main_ref[N_LAYERS], preferred_element_type=jnp.float32)
           + vec_ref[_BPOST:_BPOST + 1, :])
    # scale_by_sigma: res / used_sigmas  (EUP approximate reciprocal, free slot)
    out_ref[...] = res * pl.reciprocal(sigma_ref[...], approx=True)


# --- wrapper-side layout plumbing ----------------------------------------------
def _perm_pad_cols(a):
    """[..., 64] -> [..., 128]: even channels -> lanes 0..31, odd -> lanes 64..95."""
    ev, od = a[..., 0::2], a[..., 1::2]
    z = jnp.zeros_like(ev)
    return jnp.concatenate([ev, z, od, z], axis=-1)


def _perm_pad_rows(a):
    """[64, ...] -> [128, ...] with the same channel permutation on axis 0."""
    ev, od = a[0::2], a[1::2]
    z = jnp.zeros_like(ev)
    return jnp.concatenate([ev, z, od, z], axis=0)


def init_raw_params(key):
    """PyTorch-style raw parameters (used by the pure-JAX reference)."""
    ks = iter(jax.random.split(key, 64))

    def linear(fan_in, fan_out):
        bound = 1.0 / math.sqrt(fan_in)
        w = jax.random.uniform(next(ks), (fan_in, fan_out), jnp.float32, -bound, bound)
        b = jax.random.uniform(next(ks), (fan_out,), jnp.float32, -bound, bound)
        return w, b

    def affine():
        g = 1.0 + 0.1 * jax.random.normal(next(ks), (HIDDEN,), jnp.float32)
        b = 0.1 * jax.random.normal(next(ks), (HIDDEN,), jnp.float32)
        return g, b

    p = {}
    # GaussianFourierProjection random features (non-trainable)
    p['gauss_w'] = jax.random.normal(next(ks), (EMBED // 2,), jnp.float32) * FOURIER_SCALE
    p['w_st'], p['b_st'] = linear(EMBED, EMBED)
    p['w_pre'], p['b_pre'] = linear(IN_DIM, HIDDEN)
    p['w_pret'], p['b_pret'] = linear(EMBED, HIDDEN)
    p['g_pre'], p['be_pre'] = affine()
    for i in range(N_BLOCKS):
        p[f'w1_{i}'], p[f'b1_{i}'] = linear(HIDDEN, HIDDEN)
        p[f'w1t_{i}'], p[f'b1t_{i}'] = linear(EMBED, HIDDEN)
        p[f'g1_{i}'], p[f'be1_{i}'] = affine()
        p[f'w2_{i}'], p[f'b2_{i}'] = linear(HIDDEN, HIDDEN)
        p[f'w2t_{i}'], p[f'b2t_{i}'] = linear(EMBED, HIDDEN)
        p[f'g2_{i}'], p[f'be2_{i}'] = affine()
    p['w_post'], p['b_post'] = linear(HIDDEN, IN_DIM)
    return p


def pack_params(raw):
    """Pack raw params into the permuted / padded / fused slabs the kernel uses."""
    # layer ordering: 0=pre, 1=b1_dense1, 2=b1_dense2, 3=b2_dense1, 4=b2_dense2
    wx = [raw['w_pre']] + [raw[f'w{j}_{i}'] for i in range(N_BLOCKS) for j in (1, 2)]
    wt = [raw['w_pret']] + [raw[f'w{j}t_{i}'] for i in range(N_BLOCKS) for j in (1, 2)]
    bx = [raw['b_pre']] + [raw[f'b{j}_{i}'] for i in range(N_BLOCKS) for j in (1, 2)]
    bt = [raw['b_pret']] + [raw[f'b{j}t_{i}'] for i in range(N_BLOCKS) for j in (1, 2)]
    gs = [raw['g_pre']] + [raw[f'g{j}_{i}'] for i in range(N_BLOCKS) for j in (1, 2)]
    bes = [raw['be_pre']] + [raw[f'be{j}_{i}'] for i in range(N_BLOCKS) for j in (1, 2)]

    # x-path dense weights: hidden axes permuted + zero-padded to 128 lanes
    w_main = []
    w0 = jnp.pad(raw['w_pre'], ((0, PAD_IN - IN_DIM), (0, 0)))        # 126 -> 128 rows
    w_main.append(_perm_pad_cols(w0))
    for l in range(1, N_LAYERS):
        w_main.append(_perm_pad_cols(_perm_pad_rows(wx[l])))
    w_post = jnp.pad(_perm_pad_rows(raw['w_post']), ((0, 0), (0, PAD_OUT - IN_DIM)))
    w_main.append(w_post)                                             # index N_LAYERS
    w_main = jnp.stack(w_main)                                        # [6, 128, 128]

    # the 5 time-conditioning projections fused along the output (lane) dim
    w_tall = jnp.concatenate([_perm_pad_cols(w) for w in wt], axis=-1)  # [32, 640]

    # vector parameter slab [17, 128]
    rows = []
    for l in range(N_LAYERS):
        rows.append(_perm_pad_cols(bx[l] + bt[l]))     # temb bias folded into dense bias
    for l in range(N_LAYERS):
        rows.append(_perm_pad_cols(gs[l]))
    for l in range(N_LAYERS):
        rows.append(_perm_pad_cols(bes[l]))
    rows.append(jnp.pad(raw['b_st'], (0, HP - EMBED)))
    rows.append(jnp.pad(raw['b_post'], (0, PAD_OUT - IN_DIM)))
    vec = jnp.stack(rows)                              # [17, 128]

    return {'gauss_w': raw['gauss_w'], 'w_st': raw['w_st'],
            'w_tall': w_tall, 'w_main': w_main, 'vec': vec}


def _fourier_features(t, gauss_w):
    # GaussianFourierProjection applied to log(used_sigmas) = log(t)
    x_proj = jnp.log(t)[:, None] * gauss_w[None, :] * 2.0 * jnp.pi
    return jnp.concatenate([jnp.sin(x_proj), jnp.cos(x_proj)], axis=-1)   # [B, 32]


def timefc_forward(x, t, packed):
    """x: [B, 126] f32, t: [B] f32 (sigmas > 0). Returns [B, 126] f32."""
    B = x.shape[0]
    temb_f = _fourier_features(t, packed['gauss_w'])
    x_pad = jnp.pad(x, ((0, 0), (0, PAD_IN - IN_DIM)))   # lane-dense contraction
    sigma = t[:, None]

    vspec = pl.BlockSpec(memory_space=pltpu.MemorySpace.VMEM)
    # NOTE: for large batched sampling, tile the batch with a 1-D grid and
    # dimension_semantics=("parallel",) so both v7x TensorCores split the work;
    # at B=2 a grid would only add fixed per-step overhead.
    out = pl.pallas_call(
        timefc_kernel,
        out_shape=jax.ShapeDtypeStruct((B, PAD_OUT), jnp.float32),
        in_specs=[vspec] * 7,
        out_specs=vspec,
    )(x_pad, temb_f, sigma, packed['w_st'], packed['w_tall'],
      packed['w_main'], packed['vec'])
    return out[:, :IN_DIM]


# --- pure-JAX reference (mirrors the PyTorch forward, eval mode) ---------------
def timefc_ref(x, t, raw):
    temb_f = _fourier_features(t, raw['gauss_w'])
    temb = _act(temb_f @ raw['w_st'] + raw['b_st'])

    def gn(h, gamma, beta):
        g = h.reshape(h.shape[0], HIDDEN // GSIZE, GSIZE)
        mean = g.mean(-1, keepdims=True)
        var = ((g - mean) ** 2).mean(-1, keepdims=True)
        g = (g - mean) / jnp.sqrt(var + GN_EPS)
        return g.reshape(h.shape[0], HIDDEN) * gamma + beta

    h = x @ raw['w_pre'] + raw['b_pre'] + temb @ raw['w_pret'] + raw['b_pret']
    h = _act(gn(h, raw['g_pre'], raw['be_pre']))
    for i in range(N_BLOCKS):
        h1 = h @ raw[f'w1_{i}'] + raw[f'b1_{i}'] + temb @ raw[f'w1t_{i}'] + raw[f'b1t_{i}']
        h1 = _act(gn(h1, raw[f'g1_{i}'], raw[f'be1_{i}']))
        h2 = h1 @ raw[f'w2_{i}'] + raw[f'b2_{i}'] + temb @ raw[f'w2t_{i}'] + raw[f'b2t_{i}']
        h2 = _act(gn(h2, raw[f'g2_{i}'], raw[f'be2_{i}']))
        h = h + h2
    res = h @ raw['w_post'] + raw['b_post']
    return res / t[:, None]


if __name__ == "__main__":
    key = jax.random.PRNGKey(0)
    pkey, xkey, tkey = jax.random.split(key, 3)

    raw = init_raw_params(pkey)
    packed = pack_params(raw)

    B = 2
    x = jax.random.normal(xkey, (B, IN_DIM), jnp.float32)
    t = jax.random.uniform(tkey, (B,), jnp.float32, minval=0.5, maxval=2.0)  # sigmas > 0

    out = jax.block_until_ready(timefc_forward(x, t, packed))
    ref = timefc_ref(x, t, raw)

    assert out.shape == (B, IN_DIM) and out.dtype == jnp.float32
    # fp32 matmul path: the only appreciable error source is the EUP approximate
    # reciprocal used for the final sigma scaling -> tight combined tolerance.
    err = jnp.abs(out - ref)
    tol = 1e-2 + 1e-2 * jnp.abs(ref)
    assert bool(jnp.all(err <= tol)), f"max abs error {float(jnp.max(err))}"
    print("KERNEL_OK")
</pallas_src>

<mosaic_0001>
module attributes {stable_mosaic.version = 11 : i64} {
  func.func @timefc_kernel(%arg0: memref<2x128xf32, #tpu.memory_space<vmem>>, %arg1: memref<2x32xf32, #tpu.memory_space<vmem>>, %arg2: memref<2x1xf32, #tpu.memory_space<vmem>>, %arg3: memref<32x32xf32, #tpu.memory_space<vmem>>, %arg4: memref<32x640xf32, #tpu.memory_space<vmem>>, %arg5: memref<6x128x128xf32, #tpu.memory_space<vmem>>, %arg6: memref<17x128xf32, #tpu.memory_space<vmem>>, %arg7: memref<2x128xf32, #tpu.memory_space<vmem>>) attributes {dimension_semantics = [], scalar_prefetch = 0 : i64, scratch_operands = 0 : i64, tpu.core_type = #tpu.core_type<tc>} {
    %c0 = arith.constant 0 : index
    %c0_0 = arith.constant 0 : index
    %0 = vector.load %arg0[%c0, %c0_0] : memref<2x128xf32, #tpu.memory_space<vmem>>, vector<2x128xf32>
    %c0_1 = arith.constant 0 : index
    %c0_2 = arith.constant 0 : index
    %1 = vector.load %arg1[%c0_1, %c0_2] : memref<2x32xf32, #tpu.memory_space<vmem>>, vector<2x32xf32>
    %c15 = arith.constant 15 : index
    %c0_3 = arith.constant 0 : index
    %2 = vector.load %arg6[%c15, %c0_3] : memref<17x128xf32, #tpu.memory_space<vmem>>, vector<1x128xf32>
    %3 = vector.extract_strided_slice %2 {offsets = [0, 0], sizes = [1, 32], strides = [1, 1]} : vector<1x128xf32> to vector<1x32xf32>
    %c0_4 = arith.constant 0 : index
    %c0_5 = arith.constant 0 : index
    %4 = vector.load %arg3[%c0_4, %c0_5] : memref<32x32xf32, #tpu.memory_space<vmem>>, vector<32x32xf32>
    %cst = arith.constant dense<0.000000e+00> : vector<2x32xf32>
    %5 = tpu.matmul %1, %4, %cst {dimension_numbers = #tpu.dot_dimension_numbers<[1], [0], [0], [1], [0, 0, 1, 1], [], []>} : vector<2x32xf32>, vector<32x32xf32>, vector<2x32xf32> -> vector<2x32xf32>
    %6 = vector.broadcast %3 : vector<1x32xf32> to vector<2x32xf32>
    %7 = arith.addf %5, %6 : vector<2x32xf32>
    %8 = arith.negf %7 : vector<2x32xf32>
    %9 = math.exp %8 : vector<2x32xf32>
    %cst_6 = arith.constant 1.000000e+00 : f32
    %10 = vector.broadcast %cst_6 : f32 to vector<2x32xf32>
    %11 = arith.addf %10, %9 : vector<2x32xf32>
    %12 = arith.divf %10, %11 : vector<2x32xf32>
    %13 = arith.mulf %7, %12 : vector<2x32xf32>
    %c0_7 = arith.constant 0 : index
    %c0_8 = arith.constant 0 : index
    %14 = vector.load %arg4[%c0_7, %c0_8] : memref<32x640xf32, #tpu.memory_space<vmem>>, vector<32x640xf32>
    %cst_9 = arith.constant dense<0.000000e+00> : vector<2x640xf32>
    %15 = tpu.matmul %13, %14, %cst_9 {dimension_numbers = #tpu.dot_dimension_numbers<[1], [0], [0], [1], [0, 0, 1, 1], [], []>} : vector<2x32xf32>, vector<32x640xf32>, vector<2x640xf32> -> vector<2x640xf32>
    %c0_10 = arith.constant 0 : index
    %c0_11 = arith.constant 0 : index
    %c0_12 = arith.constant 0 : index
    %16 = vector.load %arg5[%c0_10, %c0_11, %c0_12] : memref<6x128x128xf32, #tpu.memory_space<vmem>>, vector<1x128x128xf32>
    %17 = vector.shape_cast %16 : vector<1x128x128xf32> to vector<128x128xf32>
    %cst_13 = arith.constant dense<0.000000e+00> : vector<2x128xf32>
    %18 = tpu.matmul %0, %17, %cst_13 {dimension_numbers = #tpu.dot_dimension_numbers<[1], [0], [0], [1], [0, 0, 1, 1], [], []>} : vector<2x128xf32>, vector<128x128xf32>, vector<2x128xf32> -> vector<2x128xf32>
    %19 = vector.extract_strided_slice %15 {offsets = [0, 0], sizes = [2, 128], strides = [1, 1]} : vector<2x640xf32> to vector<2x128xf32>
    %20 = arith.addf %18, %19 : vector<2x128xf32>
    %c0_14 = arith.constant 0 : index
    %c0_15 = arith.constant 0 : index
    %21 = vector.load %arg6[%c0_14, %c0_15] : memref<17x128xf32, #tpu.memory_space<vmem>>, vector<1x128xf32>
    %22 = vector.broadcast %21 : vector<1x128xf32> to vector<2x128xf32>
    %23 = arith.addf %20, %22 : vector<2x128xf32>
    %c5 = arith.constant 5 : index
    %c0_16 = arith.constant 0 : index
    %24 = vector.load %arg6[%c5, %c0_16] : memref<17x128xf32, #tpu.memory_space<vmem>>, vector<1x128xf32>
    %c10 = arith.constant 10 : index
    %c0_17 = arith.constant 0 : index
    %25 = vector.load %arg6[%c10, %c0_17] : memref<17x128xf32, #tpu.memory_space<vmem>>, vector<1x128xf32>
    %c64_i32 = arith.constant 64 : i32
    %26 = tpu.dynamic_rotate %23 by %c64_i32 dim 1 : vector<2x128xf32>, i32 -> vector<2x128xf32>
    %27 = arith.subf %23, %26 : vector<2x128xf32>
    %cst_18 = arith.constant 5.000000e-01 : f32
    %28 = vector.broadcast %cst_18 : f32 to vector<2x128xf32>
    %29 = arith.mulf %27, %28 : vector<2x128xf32>
    %30 = arith.mulf %29, %29 : vector<2x128xf32>
    %cst_19 = arith.constant 9.99999974E-6 : f32
    %31 = vector.broadcast %cst_19 : f32 to vector<2x128xf32>
    %32 = arith.addf %30, %31 : vector<2x128xf32>
    %33 = math.rsqrt %32 : vector<2x128xf32>
    %34 = arith.mulf %29, %33 : vector<2x128xf32>
    %35 = vector.broadcast %24 : vector<1x128xf32> to vector<2x128xf32>
    %36 = arith.mulf %34, %35 : vector<2x128xf32>
    %37 = vector.broadcast %25 : vector<1x128xf32> to vector<2x128xf32>
    %38 = arith.addf %36, %37 : vector<2x128xf32>
    %39 = arith.negf %38 : vector<2x128xf32>
    %40 = math.exp %39 : vector<2x128xf32>
    %cst_20 = arith.constant 1.000000e+00 : f32
    %41 = vector.broadcast %cst_20 : f32 to vector<2x128xf32>
    %42 = arith.addf %41, %40 : vector<2x128xf32>
    %43 = arith.divf %41, %42 : vector<2x128xf32>
    %44 = arith.mulf %38, %43 : vector<2x128xf32>
    %c1 = arith.constant 1 : index
    %c0_21 = arith.constant 0 : index
    %c0_22 = arith.constant 0 : index
    %45 = vector.load %arg5[%c1, %c0_21, %c0_22] : memref<6x128x128xf32, #tpu.memory_space<vmem>>, vector<1x128x128xf32>
    %46 = vector.shape_cast %45 : vector<1x128x128xf32> to vector<128x128xf32>
    %cst_23 = arith.constant dense<0.000000e+00> : vector<2x128xf32>
    %47 = tpu.matmul %44, %46, %cst_23 {dimension_numbers = #tpu.dot_dimension_numbers<[1], [0], [0], [1], [0, 0, 1, 1], [], []>} : vector<2x128xf32>, vector<128x128xf32>, vector<2x128xf32> -> vector<2x128xf32>
    %48 = vector.extract_strided_slice %15 {offsets = [0, 128], sizes = [2, 128], strides = [1, 1]} : vector<2x640xf32> to vector<2x128xf32>
    %49 = arith.addf %47, %48 : vector<2x128xf32>
    %c1_24 = arith.constant 1 : index
    %c0_25 = arith.constant 0 : index
    %50 = vector.load %arg6[%c1_24, %c0_25] : memref<17x128xf32, #tpu.memory_space<vmem>>, vector<1x128xf32>
    %51 = vector.broadcast %50 : vector<1x128xf32> to vector<2x128xf32>
    %52 = arith.addf %49, %51 : vector<2x128xf32>
    %c6 = arith.constant 6 : index
    %c0_26 = arith.constant 0 : index
    %53 = vector.load %arg6[%c6, %c0_26] : memref<17x128xf32, #tpu.memory_space<vmem>>, vector<1x128xf32>
    %c11 = arith.constant 11 : index
    %c0_27 = arith.constant 0 : index
    %54 = vector.load %arg6[%c11, %c0_27] : memref<17x128xf32, #tpu.memory_space<vmem>>, vector<1x128xf32>
    %c64_i32_28 = arith.constant 64 : i32
    %55 = tpu.dynamic_rotate %52 by %c64_i32_28 dim 1 : vector<2x128xf32>, i32 -> vector<2x128xf32>
    %56 = arith.subf %52, %55 : vector<2x128xf32>
    %cst_29 = arith.constant 5.000000e-01 : f32
    %57 = vector.broadcast %cst_29 : f32 to vector<2x128xf32>
    %58 = arith.mulf %56, %57 : vector<2x128xf32>
    %59 = arith.mulf %58, %58 : vector<2x128xf32>
    %cst_30 = arith.constant 9.99999974E-6 : f32
    %60 = vector.broadcast %cst_30 : f32 to vector<2x128xf32>
    %61 = arith.addf %59, %60 : vector<2x128xf32>
    %62 = math.rsqrt %61 : vector<2x128xf32>
    %63 = arith.mulf %58, %62 : vector<2x128xf32>
    %64 = vector.broadcast %53 : vector<1x128xf32> to vector<2x128xf32>
    %65 = arith.mulf %63, %64 : vector<2x128xf32>
    %66 = vector.broadcast %54 : vector<1x128xf32> to vector<2x128xf32>
    %67 = arith.addf %65, %66 : vector<2x128xf32>
    %68 = arith.negf %67 : vector<2x128xf32>
    %69 = math.exp %68 : vector<2x128xf32>
    %cst_31 = arith.constant 1.000000e+00 : f32
    %70 = vector.broadcast %cst_31 : f32 to vector<2x128xf32>
    %71 = arith.addf %70, %69 : vector<2x128xf32>
    %72 = arith.divf %70, %71 : vector<2x128xf32>
    %73 = arith.mulf %67, %72 : vector<2x128xf32>
    %c2 = arith.constant 2 : index
    %c0_32 = arith.constant 0 : index
    %c0_33 = arith.constant 0 : index
    %74 = vector.load %arg5[%c2, %c0_32, %c0_33] : memref<6x128x128xf32, #tpu.memory_space<vmem>>, vector<1x128x128xf32>
    %75 = vector.shape_cast %74 : vector<1x128x128xf32> to vector<128x128xf32>
    %cst_34 = arith.constant dense<0.000000e+00> : vector<2x128xf32>
    %76 = tpu.matmul %73, %75, %cst_34 {dimension_numbers = #tpu.dot_dimension_numbers<[1], [0], [0], [1], [0, 0, 1, 1], [], []>} : vector<2x128xf32>, vector<128x128xf32>, vector<2x128xf32> -> vector<2x128xf32>
    %77 = vector.extract_strided_slice %15 {offsets = [0, 256], sizes = [2, 128], strides = [1, 1]} : vector<2x640xf32> to vector<2x128xf32>
    %78 = arith.addf %76, %77 : vector<2x128xf32>
    %c2_35 = arith.constant 2 : index
    %c0_36 = arith.constant 0 : index
    %79 = vector.load %arg6[%c2_35, %c0_36] : memref<17x128xf32, #tpu.memory_space<vmem>>, vector<1x128xf32>
    %80 = vector.broadcast %79 : vector<1x128xf32> to vector<2x128xf32>
    %81 = arith.addf %78, %80 : vector<2x128xf32>
    %c7 = arith.constant 7 : index
    %c0_37 = arith.constant 0 : index
    %82 = vector.load %arg6[%c7, %c0_37] : memref<17x128xf32, #tpu.memory_space<vmem>>, vector<1x128xf32>
    %c12 = arith.constant 12 : index
    %c0_38 = arith.constant 0 : index
    %83 = vector.load %arg6[%c12, %c0_38] : memref<17x128xf32, #tpu.memory_space<vmem>>, vector<1x128xf32>
    %c64_i32_39 = arith.constant 64 : i32
    %84 = tpu.dynamic_rotate %81 by %c64_i32_39 dim 1 : vector<2x128xf32>, i32 -> vector<2x128xf32>
    %85 = arith.subf %81, %84 : vector<2x128xf32>
    %cst_40 = arith.constant 5.000000e-01 : f32
    %86 = vector.broadcast %cst_40 : f32 to vector<2x128xf32>
    %87 = arith.mulf %85, %86 : vector<2x128xf32>
    %88 = arith.mulf %87, %87 : vector<2x128xf32>
    %cst_41 = arith.constant 9.99999974E-6 : f32
    %89 = vector.broadcast %cst_41 : f32 to vector<2x128xf32>
    %90 = arith.addf %88, %89 : vector<2x128xf32>
    %91 = math.rsqrt %90 : vector<2x128xf32>
    %92 = arith.mulf %87, %91 : vector<2x128xf32>
    %93 = vector.broadcast %82 : vector<1x128xf32> to vector<2x128xf32>
    %94 = arith.mulf %92, %93 : vector<2x128xf32>
    %95 = vector.broadcast %83 : vector<1x128xf32> to vector<2x128xf32>
    %96 = arith.addf %94, %95 : vector<2x128xf32>
    %97 = arith.negf %96 : vector<2x128xf32>
    %98 = math.exp %97 : vector<2x128xf32>
    %cst_42 = arith.constant 1.000000e+00 : f32
    %99 = vector.broadcast %cst_42 : f32 to vector<2x128xf32>
    %100 = arith.addf %99, %98 : vector<2x128xf32>
    %101 = arith.divf %99, %100 : vector<2x128xf32>
    %102 = arith.mulf %96, %101 : vector<2x128xf32>
    %103 = arith.addf %44, %102 : vector<2x128xf32>
    %c3 = arith.constant 3 : index
    %c0_43 = arith.constant 0 : index
    %c0_44 = arith.constant 0 : index
    %104 = vector.load %arg5[%c3, %c0_43, %c0_44] : memref<6x128x128xf32, #tpu.memory_space<vmem>>, vector<1x128x128xf32>
    %105 = vector.shape_cast %104 : vector<1x128x128xf32> to vector<128x128xf32>
    %cst_45 = arith.constant dense<0.000000e+00> : vector<2x128xf32>
    %106 = tpu.matmul %103, %105, %cst_45 {dimension_numbers = #tpu.dot_dimension_numbers<[1], [0], [0], [1], [0, 0, 1, 1], [], []>} : vector<2x128xf32>, vector<128x128xf32>, vector<2x128xf32> -> vector<2x128xf32>
    %107 = vector.extract_strided_slice %15 {offsets = [0, 384], sizes = [2, 128], strides = [1, 1]} : vector<2x640xf32> to vector<2x128xf32>
    %108 = arith.addf %106, %107 : vector<2x128xf32>
    %c3_46 = arith.constant 3 : index
    %c0_47 = arith.constant 0 : index
    %109 = vector.load %arg6[%c3_46, %c0_47] : memref<17x128xf32, #tpu.memory_space<vmem>>, vector<1x128xf32>
    %110 = vector.broadcast %109 : vector<1x128xf32> to vector<2x128xf32>
    %111 = arith.addf %108, %110 : vector<2x128xf32>
    %c8 = arith.constant 8 : index
    %c0_48 = arith.constant 0 : index
    %112 = vector.load %arg6[%c8, %c0_48] : memref<17x128xf32, #tpu.memory_space<vmem>>, vector<1x128xf32>
    %c13 = arith.constant 13 : index
    %c0_49 = arith.constant 0 : index
    %113 = vector.load %arg6[%c13, %c0_49] : memref<17x128xf32, #tpu.memory_space<vmem>>, vector<1x128xf32>
    %c64_i32_50 = arith.constant 64 : i32
    %114 = tpu.dynamic_rotate %111 by %c64_i32_50 dim 1 : vector<2x128xf32>, i32 -> vector<2x128xf32>
    %115 = arith.subf %111, %114 : vector<2x128xf32>
    %cst_51 = arith.constant 5.000000e-01 : f32
    %116 = vector.broadcast %cst_51 : f32 to vector<2x128xf32>
    %117 = arith.mulf %115, %116 : vector<2x128xf32>
    %118 = arith.mulf %117, %117 : vector<2x128xf32>
    %cst_52 = arith.constant 9.99999974E-6 : f32
    %119 = vector.broadcast %cst_52 : f32 to vector<2x128xf32>
    %120 = arith.addf %118, %119 : vector<2x128xf32>
    %121 = math.rsqrt %120 : vector<2x128xf32>
    %122 = arith.mulf %117, %121 : vector<2x128xf32>
    %123 = vector.broadcast %112 : vector<1x128xf32> to vector<2x128xf32>
    %124 = arith.mulf %122, %123 : vector<2x128xf32>
    %125 = vector.broadcast %113 : vector<1x128xf32> to vector<2x128xf32>
    %126 = arith.addf %124, %125 : vector<2x128xf32>
    %127 = arith.negf %126 : vector<2x128xf32>
    %128 = math.exp %127 : vector<2x128xf32>
    %cst_53 = arith.constant 1.000000e+00 : f32
    %129 = vector.broadcast %cst_53 : f32 to vector<2x128xf32>
    %130 = arith.addf %129, %128 : vector<2x128xf32>
    %131 = arith.divf %129, %130 : vector<2x128xf32>
    %132 = arith.mulf %126, %131 : vector<2x128xf32>
    %c4 = arith.constant 4 : index
    %c0_54 = arith.constant 0 : index
    %c0_55 = arith.constant 0 : index
    %133 = vector.load %arg5[%c4, %c0_54, %c0_55] : memref<6x128x128xf32, #tpu.memory_space<vmem>>, vector<1x128x128xf32>
    %134 = vector.shape_cast %133 : vector<1x128x128xf32> to vector<128x128xf32>
    %cst_56 = arith.constant dense<0.000000e+00> : vector<2x128xf32>
    %135 = tpu.matmul %132, %134, %cst_56 {dimension_numbers = #tpu.dot_dimension_numbers<[1], [0], [0], [1], [0, 0, 1, 1], [], []>} : vector<2x128xf32>, vector<128x128xf32>, vector<2x128xf32> -> vector<2x128xf32>
    %136 = vector.extract_strided_slice %15 {offsets = [0, 512], sizes = [2, 128], strides = [1, 1]} : vector<2x640xf32> to vector<2x128xf32>
    %137 = arith.addf %135, %136 : vector<2x128xf32>
    %c4_57 = arith.constant 4 : index
    %c0_58 = arith.constant 0 : index
    %138 = vector.load %arg6[%c4_57, %c0_58] : memref<17x128xf32, #tpu.memory_space<vmem>>, vector<1x128xf32>
    %139 = vector.broadcast %138 : vector<1x128xf32> to vector<2x128xf32>
    %140 = arith.addf %137, %139 : vector<2x128xf32>
    %c9 = arith.constant 9 : index
    %c0_59 = arith.constant 0 : index
    %141 = vector.load %arg6[%c9, %c0_59] : memref<17x128xf32, #tpu.memory_space<vmem>>, vector<1x128xf32>
    %c14 = arith.constant 14 : index
    %c0_60 = arith.constant 0 : index
    %142 = vector.load %arg6[%c14, %c0_60] : memref<17x128xf32, #tpu.memory_space<vmem>>, vector<1x128xf32>
    %c64_i32_61 = arith.constant 64 : i32
    %143 = tpu.dynamic_rotate %140 by %c64_i32_61 dim 1 : vector<2x128xf32>, i32 -> vector<2x128xf32>
    %144 = arith.subf %140, %143 : vector<2x128xf32>
    %cst_62 = arith.constant 5.000000e-01 : f32
    %145 = vector.broadcast %cst_62 : f32 to vector<2x128xf32>
    %146 = arith.mulf %144, %145 : vector<2x128xf32>
    %147 = arith.mulf %146, %146 : vector<2x128xf32>
    %cst_63 = arith.constant 9.99999974E-6 : f32
    %148 = vector.broadcast %cst_63 : f32 to vector<2x128xf32>
    %149 = arith.addf %147, %148 : vector<2x128xf32>
    %150 = math.rsqrt %149 : vector<2x128xf32>
    %151 = arith.mulf %146, %150 : vector<2x128xf32>
    %152 = vector.broadcast %141 : vector<1x128xf32> to vector<2x128xf32>
    %153 = arith.mulf %151, %152 : vector<2x128xf32>
    %154 = vector.broadcast %142 : vector<1x128xf32> to vector<2x128xf32>
    %155 = arith.addf %153, %154 : vector<2x128xf32>
    %156 = arith.negf %155 : vector<2x128xf32>
    %157 = math.exp %156 : vector<2x128xf32>
    %cst_64 = arith.constant 1.000000e+00 : f32
    %158 = vector.broadcast %cst_64 : f32 to vector<2x128xf32>
    %159 = arith.addf %158, %157 : vector<2x128xf32>
    %160 = arith.divf %158, %159 : vector<2x128xf32>
    %161 = arith.mulf %155, %160 : vector<2x128xf32>
    %162 = arith.addf %103, %161 : vector<2x128xf32>
    %c5_65 = arith.constant 5 : index
    %c0_66 = arith.constant 0 : index
    %c0_67 = arith.constant 0 : index
    %163 = vector.load %arg5[%c5_65, %c0_66, %c0_67] : memref<6x128x128xf32, #tpu.memory_space<vmem>>, vector<1x128x128xf32>
    %164 = vector.shape_cast %163 : vector<1x128x128xf32> to vector<128x128xf32>
    %cst_68 = arith.constant dense<0.000000e+00> : vector<2x128xf32>
    %165 = tpu.matmul %162, %164, %cst_68 {dimension_numbers = #tpu.dot_dimension_numbers<[1], [0], [0], [1], [0, 0, 1, 1], [], []>} : vector<2x128xf32>, vector<128x128xf32>, vector<2x128xf32> -> vector<2x128xf32>
    %c16 = arith.constant 16 : index
    %c0_69 = arith.constant 0 : index
    %166 = vector.load %arg6[%c16, %c0_69] : memref<17x128xf32, #tpu.memory_space<vmem>>, vector<1x128xf32>
    %167 = vector.broadcast %166 : vector<1x128xf32> to vector<2x128xf32>
    %168 = arith.addf %165, %167 : vector<2x128xf32>
    %c0_70 = arith.constant 0 : index
    %c0_71 = arith.constant 0 : index
    %169 = vector.load %arg2[%c0_70, %c0_71] : memref<2x1xf32, #tpu.memory_space<vmem>>, vector<2x1xf32>
    %170 = tpu.reciprocal %169 {approx = true} : vector<2x1xf32> -> vector<2x1xf32>
    %171 = vector.broadcast %170 : vector<2x1xf32> to vector<2x128xf32>
    %172 = arith.mulf %168, %171 : vector<2x128xf32>
    %c0_72 = arith.constant 0 : index
    %c0_73 = arith.constant 0 : index
    %173 = vector.load %arg7[%c0_72, %c0_73] : memref<2x128xf32, #tpu.memory_space<vmem>>, vector<2x128xf32>
    tpu.vector_store %arg7[%c0_72, %c0_73], %172 {strides = array<i32>} : memref<2x128xf32, #tpu.memory_space<vmem>>, vector<2x128xf32>,
    return
  }
}

</mosaic_0001>

<llo_original>
// kernel: tpu_custom_call.1
$region0: #{tpu_custom_call.1}
  #allocation0 [shape = 'u32[]', space=smem, size = 0x4, offset = 0x4, fixed_abs, tag = 'smem constant byte address 0x4 - core index']
  #allocation1 [shape = 'u32[144,128]{1,0:T(1,128)}', space=vmem, size = 0x12000, scoped, tag = 'internal scratch']
  %s0 = inlined_call_operand.vmem [shape: f32[2,128], index: 0, kind: input, shape index: {}]
  %s1 = inlined_call_operand.hbm [shape: f32[2,32], index: 1, kind: input, shape index: {}]
  %s2 = inlined_call_operand.vmem [shape: f32[2,1], index: 2, kind: input, shape index: {}]
  %s3 = inlined_call_operand.hbm [shape: f32[32,32], index: 3, kind: input, shape index: {}]
  %s4 = inlined_call_operand.hbm [shape: f32[32,640], index: 4, kind: input, shape index: {}]
  %s5 = inlined_call_operand.hbm [shape: f32[6,128,128], index: 5, kind: input, shape index: {}]
  %s6 = inlined_call_operand.vmem [shape: f32[17,128], index: 6, kind: input, shape index: {}]
  %s7 = inlined_call_operand.hbm [shape: f32[2,128], index: 7, kind: output, shape index: {}]
  %s8 = sld [smem:[#allocation0]]
  $region54: #{tpu_custom_call.1} parent=0
    _
  %s10 = ssub.s32 1, %s8
  %s11 = scalar_select 0, %s10, %s8
  $region1: #{tpu_custom_call.1} parent=0
    #allocation2 [shape = 'u8[1024]{0}', space=vmem, size = 0x400, scoped, tag = 'input window, operand 1, single buffered']
    #allocation3 [shape = 's32[1]{0}', space=sflag, size = 0x4, scoped, tag = 'scoped memory for tpu_custom_call.1']
    #allocation4 [shape = 's32[1]{0}', space=sflag, size = 0x4, scoped, tag = 'scoped memory for tpu_custom_call.1']
    #allocation5 [shape = 'u8[16384]{0}', space=vmem, size = 0x4000, scoped, tag = 'input window, operand 3, single buffered']
    #allocation6 [shape = 's32[1]{0}', space=sflag, size = 0x4, scoped, tag = 'scoped memory for tpu_custom_call.1']
    #allocation7 [shape = 'u8[81920]{0}', space=vmem, size = 0x14000, scoped, tag = 'input window, operand 4, single buffered']
    #allocation8 [shape = 'u8[393216]{0}', space=vmem, size = 0x60000, scoped, tag = 'input window, operand 5, single buffered']
    #allocation9 [shape = 's32[1]{0}', space=sflag, size = 0x4, scoped, tag = 'scoped memory for tpu_custom_call.1']
    #allocation10 [shape = 'u8[1024]{0}', space=vmem, size = 0x400, scoped, tag = 'output window, operand 0, single buffered']
    %12 = vsyncpa [#allocation3], 0
    %13 = vsyncpa [#allocation6], 0
    %14 = vsyncpa [#allocation9], 0
    %15 = vsyncpa [#allocation4], 0
    // Predicated region
    $region2: #{tpu_custom_call.1} parent=1 // pred_check
      _
    $region3: #{tpu_custom_call.1} parent=1 // pred_check_branch
      %17 = sbr.rel (0) target = $region5
    $region4: #{tpu_custom_call.1} parent=1 // pred_region
      _
    $region5: #{tpu_custom_call.1} parent=1 // pred_fallthru
      _
    // Predicated region
    $region6: #{tpu_custom_call.1} parent=1 // pred_check
      _
    $region7: #{tpu_custom_call.1} parent=1 // pred_check_branch
      %19 = sbr.rel (0) target = $region9
    $region8: #{tpu_custom_call.1} parent=1 // pred_region
      %s21 = ssub.s32 32, 32
      %22 = vsyncadd [#allocation3], %s21
      %s24 = sshll.u32 [#allocation2], 4
      %s25 = int_to_ptr.vmem [resolvable:$true] %s24
      %27 = dma.hbm_to_vmem [thread:$0]  %s1, 32, %s25, [#allocation3]
    $region9: #{tpu_custom_call.1} parent=1 // pred_fallthru
      _
    // Predicated region
    $region10: #{tpu_custom_call.1} parent=1 // pred_check
      _
    $region11: #{tpu_custom_call.1} parent=1 // pred_check_branch
      %29 = sbr.rel (0) target = $region13
    $region12: #{tpu_custom_call.1} parent=1 // pred_region
      _
    $region13: #{tpu_custom_call.1} parent=1 // pred_fallthru
      _
    // Predicated region
    $region14: #{tpu_custom_call.1} parent=1 // pred_check
      _
    $region15: #{tpu_custom_call.1} parent=1 // pred_check_branch
      %31 = sbr.rel (0) target = $region17
    $region16: #{tpu_custom_call.1} parent=1 // pred_region
      %s33 = ssub.s32 512, 512
      %34 = vsyncadd [#allocation6], %s33
      %s35 = sshll.u32 [#allocation5], 4
      %s36 = int_to_ptr.vmem [resolvable:$true] %s35
      %41 = dma.hbm_to_vmem [thread:$0]  %s3, 512, %s36, [#allocation6], 128, 128, 8
    $region17: #{tpu_custom_call.1} parent=1 // pred_fallthru
      _
    // Predicated region
    $region18: #{tpu_custom_call.1} parent=1 // pred_check
      _
    $region19: #{tpu_custom_call.1} parent=1 // pred_check_branch
      %43 = sbr.rel (0) target = $region21
    $region20: #{tpu_custom_call.1} parent=1 // pred_region
      %s45 = ssub.s32 2560, 2560
      %46 = vsyncadd [#allocation6], %s45
      %s47 = sshll.u32 [#allocation7], 4
      %s48 = int_to_ptr.vmem [resolvable:$true] %s47
      %53 = dma.hbm_to_vmem [thread:$0]  %s4, 2560, %s48, [#allocation6], 640, 640, 40
    $region21: #{tpu_custom_call.1} parent=1 // pred_fallthru
      _
    // Predicated region
    $region22: #{tpu_custom_call.1} parent=1 // pred_check
      _
    $region23: #{tpu_custom_call.1} parent=1 // pred_check_branch
      %55 = sbr.rel (0) target = $region25
    $region24: #{tpu_custom_call.1} parent=1 // pred_region
      %s57 = ssub.s32 12288, 12288
      %58 = vsyncadd [#allocation9], %s57
      %s59 = sshll.u32 [#allocation8], 4
      %s60 = int_to_ptr.vmem [resolvable:$true] %s59
      %65 = dma.hbm_to_vmem [thread:$0]  %s5, 12288, %s60, [#allocation9], 128, 128, 8
    $region25: #{tpu_custom_call.1} parent=1 // pred_fallthru
      _
    // Predicated region
    $region26: #{tpu_custom_call.1} parent=1 // pred_check
      _
    $region27: #{tpu_custom_call.1} parent=1 // pred_check_branch
      %67 = sbr.rel (0) target = $region29
    $region28: #{tpu_custom_call.1} parent=1 // pred_region
      _
    $region29: #{tpu_custom_call.1} parent=1 // pred_fallthru
      _
    // Predicated region
    $region30: #{tpu_custom_call.1} parent=1 // pred_check
      _
    $region31: #{tpu_custom_call.1} parent=1 // pred_check_branch
      %69 = sbr.rel (0) target = $region33
    $region32: #{tpu_custom_call.1} parent=1 // pred_region
      %70 = dma.done [#allocation3], 32
    $region33: #{tpu_custom_call.1} parent=1 // pred_fallthru
      _
    // Predicated region
    $region34: #{tpu_custom_call.1} parent=1 // pred_check
      _
    $region35: #{tpu_custom_call.1} parent=1 // pred_check_branch
      %72 = sbr.rel (0) target = $region37
    $region36: #{tpu_custom_call.1} parent=1 // pred_region
      %73 = dma.done [#allocation6], 512
    $region37: #{tpu_custom_call.1} parent=1 // pred_fallthru
      _
    // Predicated region
    $region38: #{tpu_custom_call.1} parent=1 // pred_check
      _
    $region39: #{tpu_custom_call.1} parent=1 // pred_check_branch
      %75 = sbr.rel (0) target = $region41
    $region40: #{tpu_custom_call.1} parent=1 // pred_region
      %76 = dma.done [#allocation6], 2560
    $region41: #{tpu_custom_call.1} parent=1 // pred_fallthru
      _
    // Predicated region
    $region42: #{tpu_custom_call.1} parent=1 // pred_check
      _
    $region43: #{tpu_custom_call.1} parent=1 // pred_check_branch
      %78 = sbr.rel (0) target = $region45
    $region44: #{tpu_custom_call.1} parent=1 // pred_region
      %79 = dma.done [#allocation9], 12288
    $region45: #{tpu_custom_call.1} parent=1 // pred_fallthru
      _
    %v80 = vld [vmem:[%s0] sm:$0x3]
    %v81 = vld [vmem:[#allocation2] sm:$0x3]
    %v82 = vld [vmem:[%s6 + $0xf] sm:$0x1]
    %v83 = vld [vmem:[#allocation5] sm:$0xff]
    %v84 = vld [vmem:[#allocation5 + $0x8] sm:$0xff]
    %v85 = vld [vmem:[#allocation5 + $0x10] sm:$0xff]
    %v86 = vld [vmem:[#allocation5 + $0x18] sm:$0xff]
    %v87 = vlaneseq
    %v88 = vshrl.u32 %v87, 7
    %v89 = vsub.s32 0, %v88
    %v90 = vrot.slane %v82, %v89
    %vm91 = vcmask 261120
    %v93 = vsel %vm91, %v81, 0
    %95 = vmatprep.subr.mxu0 0.0
    %96 = vmatpush1.msra.mxu0 %v83
    %97 = vmatprep.subr.mxu0 0.0
    %98 = vmatpush1.msra.mxu0 %v84
    %99 = vmatprep.subr.mxu0 0.0
    %100 = vmatpush1.msra.mxu0 %v85
    %101 = vmatprep.subr.mxu0 0.0
    %102 = vmatpush1.msra.mxu0 %v86
    %103 = vmatprep.subr.mxu0 0.0
    %104 = vmatpush1.msra.mxu0 0.0
    %105 = vmatprep.subr.mxu0 0.0
    %106 = vmatpush1.msra.mxu0 0.0
    %107 = vmatprep.subr.mxu0 0.0
    %108 = vmatpush1.msra.mxu0 0.0
    %109 = vmatprep.subr.mxu0 0.0
    %110 = vmatpush1.msra.mxu0 0.0
    %111 = vmatprep.subr.mxu0 0.0
    %112 = vmatpush1.msra.mxu0 0.0
    %113 = vmatprep.subr.mxu0 0.0
    %114 = vmatpush1.msra.mxu0 0.0
    %115 = vmatprep.subr.mxu0 0.0
    %116 = vmatpush1.msra.mxu0 0.0
    %117 = vmatprep.subr.mxu0 0.0
    %118 = vmatpush1.msra.mxu0 0.0
    %119 = vmatprep.subr.mxu0 0.0
    %120 = vmatpush1.msra.mxu0 0.0
    %121 = vmatprep.subr.mxu0 0.0
    %122 = vmatpush1.msra.mxu0 0.0
    %123 = vmatprep.subr.mxu0 0.0
    %124 = vmatpush1.msra.mxu0 0.0
    %125 = vmatprep.subr.mxu0 0.0
    %126 = vmatpush1.msra.mxu0 0.0
    %127 = vmatprep.subr.mxu0 0.0
    %128 = vmatpush1.msra.mxu0 0.0
    %129 = vmatprep.subr.mxu0 0.0
    %130 = vmatpush1.msra.mxu0 0.0
    %131 = vmatprep.subr.mxu0 0.0
    %132 = vmatpush1.msra.mxu0 0.0
    %133 = vmatprep.subr.mxu0 0.0
    %134 = vmatpush1.msra.mxu0 0.0
    %135 = vmatprep.subr.mxu0 0.0
    %136 = vmatpush1.msra.mxu0 0.0
    %137 = vmatprep.subr.mxu0 0.0
    %138 = vmatpush1.msra.mxu0 0.0
    %139 = vmatprep.subr.mxu0 0.0
    %140 = vmatpush1.msra.mxu0 0.0
    %141 = vmatprep.subr.mxu0 0.0
    %142 = vmatpush1.msra.mxu0 0.0
    %143 = vmatprep.subr.mxu0 0.0
    %144 = vmatpush1.msra.mxu0 0.0
    %145 = vmatprep.subr.mxu0 0.0
    %146 = vmatpush1.msra.mxu0 0.0
    %147 = vmatprep.subr.mxu0 0.0
    %148 = vmatpush1.msra.mxu0 0.0
    %149 = vmatprep.subr.mxu0 0.0
    %150 = vmatpush1.msra.mxu0 0.0
    %151 = vmatprep.subr.mxu0 0.0
    %152 = vmatpush1.msra.mxu0 0.0
    %153 = vmatprep.subr.mxu0 0.0
    %154 = vmatpush1.msra.mxu0 0.0
    %155 = vmatprep.subr.mxu0 0.0
    %156 = vmatpush1.msra.mxu0 0.0
    %157 = vmatprep.subr.mxu0 0.0
    %158 = vmatpush1.msra.mxu0 0.0
    %159 = vmatprep.mubr.f32.mxu0 0.0
    %160 = vmatmul.mubr.f32.gmra.mrb[0].mxu0 %v93
    %v161 = vpop.f32.mrb[0].mxu0
    %v162 = vadd.f32 %v90, %v161
    %v163 = vpop.f32.mrb[0].mxu0
    %164 = vdwg.mxu0
    %v165 = vxor.u32 %v162, 2147483648
    %v166 = vmul.f32 %v165, 1.442695
    %v167 = vpow.pop %v166
    %v168 = vadd.f32 %v167, 1.0
    %v169 = vrcp.pop %v168
    %v170 = vmul.f32 1.0, %v169
    %v171 = vmul.f32 %v162, %v170
    %v172 = vld [vmem:[#allocation7] sm:$0xff]
    %v173 = vld [vmem:[#allocation7 + $0x8] sm:$0xff]
    %v174 = vld [vmem:[#allocation7 + $0x10] sm:$0xff]
    %v175 = vld [vmem:[#allocation7 + $0x18] sm:$0xff]
    %v176 = vld [vmem:[#allocation7 + $0x20] sm:$0xff]
    %v177 = vld [vmem:[#allocation7 + $0x28] sm:$0xff]
    %v178 = vld [vmem:[#allocation7 + $0x30] sm:$0xff]
    %v179 = vld [vmem:[#allocation7 + $0x38] sm:$0xff]
    %v180 = vld [vmem:[#allocation7 + $0x40] sm:$0xff]
    %v181 = vld [vmem:[#allocation7 + $0x48] sm:$0xff]
    %v182 = vld [vmem:[#allocation7 + $0x50] sm:$0xff]
    %v183 = vld [vmem:[#allocation7 + $0x58] sm:$0xff]
    %v184 = vld [vmem:[#allocation7 + $0x60] sm:$0xff]
    %v185 = vld [vmem:[#allocation7 + $0x68] sm:$0xff]
    %v186 = vld [vmem:[#allocation7 + $0x70] sm:$0xff]
    %v187 = vld [vmem:[#allocation7 + $0x78] sm:$0xff]
    %v188 = vld [vmem:[#allocation7 + $0x80] sm:$0xff]
    %v189 = vld [vmem:[#allocation7 + $0x88] sm:$0xff]
    %v190 = vld [vmem:[#allocation7 + $0x90] sm:$0xff]
    %v191 = vld [vmem:[#allocation7 + $0x98] sm:$0xff]
    %v193 = vsel %vm91, %v171, 0
    %195 = vmatprep.subr.mxu0 %v173
    %196 = vmatpush1.msra.mxu0 %v172
    %197 = vmatprep.subr.mxu0 %v178
    %198 = vmatpush1.msra.mxu0 %v177
    %199 = vmatprep.subr.mxu0 %v183
    %200 = vmatpush1.msra.mxu0 %v182
    %201 = vmatprep.subr.mxu0 %v188
    %202 = vmatpush1.msra.mxu0 %v187
    %203 = vmatprep.subr.mxu0 0.0
    %204 = vmatpush1.msra.mxu0 0.0
    %205 = vmatprep.subr.mxu0 0.0
    %206 = vmatpush1.msra.mxu0 0.0
    %207 = vmatprep.subr.mxu0 0.0
    %208 = vmatpush1.msra.mxu0 0.0
    %209 = vmatprep.subr.mxu0 0.0
    %210 = vmatpush1.msra.mxu0 0.0
    %211 = vmatprep.subr.mxu0 0.0
    %212 = vmatpush1.msra.mxu0 0.0
    %213 = vmatprep.subr.mxu0 0.0
    %214 = vmatpush1.msra.mxu0 0.0
    %215 = vmatprep.subr.mxu0 0.0
    %216 = vmatpush1.msra.mxu0 0.0
    %217 = vmatprep.subr.mxu0 0.0
    %218 = vmatpush1.msra.mxu0 0.0
    %219 = vmatprep.subr.mxu0 0.0
    %220 = vmatpush1.msra.mxu0 0.0
    %221 = vmatprep.subr.mxu0 0.0
    %222 = vmatpush1.msra.mxu0 0.0
    %223 = vmatprep.subr.mxu0 0.0
    %224 = vmatpush1.msra.mxu0 0.0
    %225 = vmatprep.subr.mxu0 0.0
    %226 = vmatpush1.msra.mxu0 0.0
    %227 = vmatprep.subr.mxu0 0.0
    %228 = vmatpush1.msra.mxu0 0.0
    %229 = vmatprep.subr.mxu0 0.0
    %230 = vmatpush1.msra.mxu0 0.0
    %231 = vmatprep.subr.mxu0 0.0
    %232 = vmatpush1.msra.mxu0 0.0
    %233 = vmatprep.subr.mxu0 0.0
    %234 = vmatpush1.msra.mxu0 0.0
    %235 = vmatprep.subr.mxu0 0.0
    %236 = vmatpush1.msra.mxu0 0.0
    %237 = vmatprep.subr.mxu0 0.0
    %238 = vmatpush1.msra.mxu0 0.0
    %239 = vmatprep.subr.mxu0 0.0
    %240 = vmatpush1.msra.mxu0 0.0
    %241 = vmatprep.subr.mxu0 0.0
    %242 = vmatpush1.msra.mxu0 0.0
    %243 = vmatprep.subr.mxu0 0.0
    %244 = vmatpush1.msra.mxu0 0.0
    %245 = vmatprep.subr.mxu0 0.0
    %246 = vmatpush1.msra.mxu0 0.0
    %247 = vmatprep.subr.mxu0 0.0
    %248 = vmatpush1.msra.mxu0 0.0
    %249 = vmatprep.subr.mxu0 0.0
    %250 = vmatpush1.msra.mxu0 0.0
    %251 = vmatprep.subr.mxu0 0.0
    %252 = vmatpush1.msra.mxu0 0.0
    %253 = vmatprep.subr.mxu0 0.0
    %254 = vmatpush1.msra.mxu0 0.0
    %255 = vmatprep.subr.mxu0 0.0
    %256 = vmatpush1.msra.mxu0 0.0
    %257 = vmatprep.subr.mxu0 0.0
    %258 = vmatpush1.msra.mxu0 0.0
    %259 = vmatprep.mubr.f32.mxu0 0.0
    %260 = vmatmul.mubr.f32.gmra.mrb[0].mxu0 %v193
    %v261 = vpop.f32.mrb[0].mxu0
    %v262 = vadd.f32 0.0, %v261
    %v263 = vpop.f32.mrb[0].mxu0
    %v264 = vadd.f32 0.0, %v263
    %265 = vdwg.mxu0
    %266 = vmatprep.subr.mxu0 %v175
    %267 = vmatpush1.msra.mxu0 %v174
    %268 = vmatprep.subr.mxu0 %v180
    %269 = vmatpush1.msra.mxu0 %v179
    %270 = vmatprep.subr.mxu0 %v185
    %271 = vmatpush1.msra.mxu0 %v184
    %272 = vmatprep.subr.mxu0 %v190
    %273 = vmatpush1.msra.mxu0 %v189
    %274 = vmatprep.subr.mxu0 0.0
    %275 = vmatpush1.msra.mxu0 0.0
    %276 = vmatprep.subr.mxu0 0.0
    %277 = vmatpush1.msra.mxu0 0.0
    %278 = vmatprep.subr.mxu0 0.0
    %279 = vmatpush1.msra.mxu0 0.0
    %280 = vmatprep.subr.mxu0 0.0
    %281 = vmatpush1.msra.mxu0 0.0
    %282 = vmatprep.subr.mxu0 0.0
    %283 = vmatpush1.msra.mxu0 0.0
    %284 = vmatprep.subr.mxu0 0.0
    %285 = vmatpush1.msra.mxu0 0.0
    %286 = vmatprep.subr.mxu0 0.0
    %287 = vmatpush1.msra.mxu0 0.0
    %288 = vmatprep.subr.mxu0 0.0
    %289 = vmatpush1.msra.mxu0 0.0
    %290 = vmatprep.subr.mxu0 0.0
    %291 = vmatpush1.msra.mxu0 0.0
    %292 = vmatprep.subr.mxu0 0.0
    %293 = vmatpush1.msra.mxu0 0.0
    %294 = vmatprep.subr.mxu0 0.0
    %295 = vmatpush1.msra.mxu0 0.0
    %296 = vmatprep.subr.mxu0 0.0
    %297 = vmatpush1.msra.mxu0 0.0
    %298 = vmatprep.subr.mxu0 0.0
    %299 = vmatpush1.msra.mxu0 0.0
    %300 = vmatprep.subr.mxu0 0.0
    %301 = vmatpush1.msra.mxu0 0.0
    %302 = vmatprep.subr.mxu0 0.0
    %303 = vmatpush1.msra.mxu0 0.0
    %304 = vmatprep.subr.mxu0 0.0
    %305 = vmatpush1.msra.mxu0 0.0
    %306 = vmatprep.subr.mxu0 0.0
    %307 = vmatpush1.msra.mxu0 0.0
    %308 = vmatprep.subr.mxu0 0.0
    %309 = vmatpush1.msra.mxu0 0.0
    %310 = vmatprep.subr.mxu0 0.0
    %311 = vmatpush1.msra.mxu0 0.0
    %312 = vmatprep.subr.mxu0 0.0
    %313 = vmatpush1.msra.mxu0 0.0
    %314 = vmatprep.subr.mxu0 0.0
    %315 = vmatpush1.msra.mxu0 0.0
    %316 = vmatprep.subr.mxu0 0.0
    %317 = vmatpush1.msra.mxu0 0.0
    %318 = vmatprep.subr.mxu0 0.0
    %319 = vmatpush1.msra.mxu0 0.0
    %320 = vmatprep.subr.mxu0 0.0
    %321 = vmatpush1.msra.mxu0 0.0
    %322 = vmatprep.subr.mxu0 0.0
    %323 = vmatpush1.msra.mxu0 0.0
    %324 = vmatprep.subr.mxu0 0.0
    %325 = vmatpush1.msra.mxu0 0.0
    %326 = vmatprep.subr.mxu0 0.0
    %327 = vmatpush1.msra.mxu0 0.0
    %328 = vmatprep.subr.mxu0 0.0
    %329 = vmatpush1.msra.mxu0 0.0
    %330 = vmatprep.mubr.f32.mxu0 0.0
    %331 = vmatmul.mubr.f32.gmra.mrb[0].mxu0 %v193
    %v332 = vpop.f32.mrb[0].mxu0
    %v333 = vadd.f32 0.0, %v332
    %v334 = vpop.f32.mrb[0].mxu0
    %v335 = vadd.f32 0.0, %v334
    %336 = vdwg.mxu0
    %337 = vmatprep.subr.mxu0 0.0
    %338 = vmatpush1.msra.mxu0 %v176
    %339 = vmatprep.subr.mxu0 0.0
    %340 = vmatpush1.msra.mxu0 %v181
    %341 = vmatprep.subr.mxu0 0.0
    %342 = vmatpush1.msra.mxu0 %v186
    %343 = vmatprep.subr.mxu0 0.0
    %344 = vmatpush1.msra.mxu0 %v191
    %345 = vmatprep.subr.mxu0 0.0
    %346 = vmatpush1.msra.mxu0 0.0
    %347 = vmatprep.subr.mxu0 0.0
    %348 = vmatpush1.msra.mxu0 0.0
    %349 = vmatprep.subr.mxu0 0.0
    %350 = vmatpush1.msra.mxu0 0.0
    %351 = vmatprep.subr.mxu0 0.0
    %352 = vmatpush1.msra.mxu0 0.0
    %353 = vmatprep.subr.mxu0 0.0
    %354 = vmatpush1.msra.mxu0 0.0
    %355 = vmatprep.subr.mxu0 0.0
    %356 = vmatpush1.msra.mxu0 0.0
    %357 = vmatprep.subr.mxu0 0.0
    %358 = vmatpush1.msra.mxu0 0.0
    %359 = vmatprep.subr.mxu0 0.0
    %360 = vmatpush1.msra.mxu0 0.0
    %361 = vmatprep.subr.mxu0 0.0
    %362 = vmatpush1.msra.mxu0 0.0
    %363 = vmatprep.subr.mxu0 0.0
    %364 = vmatpush1.msra.mxu0 0.0
    %365 = vmatprep.subr.mxu0 0.0
    %366 = vmatpush1.msra.mxu0 0.0
    %367 = vmatprep.subr.mxu0 0.0
    %368 = vmatpush1.msra.mxu0 0.0
    %369 = vmatprep.subr.mxu0 0.0
    %370 = vmatpush1.msra.mxu0 0.0
    %371 = vmatprep.subr.mxu0 0.0
    %372 = vmatpush1.msra.mxu0 0.0
    %373 = vmatprep.subr.mxu0 0.0
    %374 = vmatpush1.msra.mxu0 0.0
    %375 = vmatprep.subr.mxu0 0.0
    %376 = vmatpush1.msra.mxu0 0.0
    %377 = vmatprep.subr.mxu0 0.0
    %378 = vmatpush1.msra.mxu0 0.0
    %379 = vmatprep.subr.mxu0 0.0
    %380 = vmatpush1.msra.mxu0 0.0
    %381 = vmatprep.subr.mxu0 0.0
    %382 = vmatpush1.msra.mxu0 0.0
    %383 = vmatprep.subr.mxu0 0.0
    %384 = vmatpush1.msra.mxu0 0.0
    %385 = vmatprep.subr.mxu0 0.0
    %386 = vmatpush1.msra.mxu0 0.0
    %387 = vmatprep.subr.mxu0 0.0
    %388 = vmatpush1.msra.mxu0 0.0
    %389 = vmatprep.subr.mxu0 0.0
    %390 = vmatpush1.msra.mxu0 0.0
    %391 = vmatprep.subr.mxu0 0.0
    %392 = vmatpush1.msra.mxu0 0.0
    %393 = vmatprep.subr.mxu0 0.0
    %394 = vmatpush1.msra.mxu0 0.0
    %395 = vmatprep.subr.mxu0 0.0
    %396 = vmatpush1.msra.mxu0 0.0
    %397 = vmatprep.subr.mxu0 0.0
    %398 = vmatpush1.msra.mxu0 0.0
    %399 = vmatprep.subr.mxu0 0.0
    %400 = vmatpush1.msra.mxu0 0.0
    %401 = vmatprep.mubr.f32.mxu0 0.0
    %402 = vmatmul.mubr.f32.gmra.mrb[0].mxu0 %v193
    %v403 = vpop.f32.mrb[0].mxu0
    %v404 = vadd.f32 0.0, %v403
    %v405 = vpop.f32.mrb[0].mxu0
    %406 = vdwg.mxu0
    %v407 = vld [vmem:[#allocation8] sm:$0xff]
    %v408 = vld [vmem:[#allocation8 + $0x8] sm:$0xff]
    %v409 = vld [vmem:[#allocation8 + $0x10] sm:$0xff]
    %v410 = vld [vmem:[#allocation8 + $0x18] sm:$0xff]
    %v411 = vld [vmem:[#allocation8 + $0x20] sm:$0xff]
    %v412 = vld [vmem:[#allocation8 + $0x28] sm:$0xff]
    %v413 = vld [vmem:[#allocation8 + $0x30] sm:$0xff]
    %v414 = vld [vmem:[#allocation8 + $0x38] sm:$0xff]
    %v415 = vld [vmem:[#allocation8 + $0x40] sm:$0xff]
    %v416 = vld [vmem:[#allocation8 + $0x48] sm:$0xff]
    %v417 = vld [vmem:[#allocation8 + $0x50] sm:$0xff]
    %v418 = vld [vmem:[#allocation8 + $0x58] sm:$0xff]
    %v419 = vld [vmem:[#allocation8 + $0x60] sm:$0xff]
    %v420 = vld [vmem:[#allocation8 + $0x68] sm:$0xff]
    %v421 = vld [vmem:[#allocation8 + $0x70] sm:$0xff]
    %v422 = vld [vmem:[#allocation8 + $0x78] sm:$0xff]
    %423 = vmatprep.subr.mxu0 0.0
    %424 = vmatpush1.msra.mxu0 %v407
    %425 = vmatprep.subr.mxu0 0.0
    %426 = vmatpush1.msra.mxu0 %v408
    %427 = vmatprep.subr.mxu0 0.0
    %428 = vmatpush1.msra.mxu0 %v409
    %429 = vmatprep.subr.mxu0 0.0
    %430 = vmatpush1.msra.mxu0 %v410
    %431 = vmatprep.subr.mxu0 0.0
    %432 = vmatpush1.msra.mxu0 %v411
    %433 = vmatprep.subr.mxu0 0.0
    %434 = vmatpush1.msra.mxu0 %v412
    %435 = vmatprep.subr.mxu0 0.0
    %436 = vmatpush1.msra.mxu0 %v413
    %437 = vmatprep.subr.mxu0 0.0
    %438 = vmatpush1.msra.mxu0 %v414
    %439 = vmatprep.subr.mxu0 0.0
    %440 = vmatpush1.msra.mxu0 %v415
    %441 = vmatprep.subr.mxu0 0.0
    %442 = vmatpush1.msra.mxu0 %v416
    %443 = vmatprep.subr.mxu0 0.0
    %444 = vmatpush1.msra.mxu0 %v417
    %445 = vmatprep.subr.mxu0 0.0
    %446 = vmatpush1.msra.mxu0 %v418
    %447 = vmatprep.subr.mxu0 0.0
    %448 = vmatpush1.msra.mxu0 %v419
    %449 = vmatprep.subr.mxu0 0.0
    %450 = vmatpush1.msra.mxu0 %v420
    %451 = vmatprep.subr.mxu0 0.0
    %452 = vmatpush1.msra.mxu0 %v421
    %453 = vmatprep.subr.mxu0 0.0
    %454 = vmatpush1.msra.mxu0 %v422
    %455 = vmatprep.subr.mxu0 0.0
    %456 = vmatpush1.msra.mxu0 0.0
    %457 = vmatprep.subr.mxu0 0.0
    %458 = vmatpush1.msra.mxu0 0.0
    %459 = vmatprep.subr.mxu0 0.0
    %460 = vmatpush1.msra.mxu0 0.0
    %461 = vmatprep.subr.mxu0 0.0
    %462 = vmatpush1.msra.mxu0 0.0
    %463 = vmatprep.subr.mxu0 0.0
    %464 = vmatpush1.msra.mxu0 0.0
    %465 = vmatprep.subr.mxu0 0.0
    %466 = vmatpush1.msra.mxu0 0.0
    %467 = vmatprep.subr.mxu0 0.0
    %468 = vmatpush1.msra.mxu0 0.0
    %469 = vmatprep.subr.mxu0 0.0
    %470 = vmatpush1.msra.mxu0 0.0
    %471 = vmatprep.subr.mxu0 0.0
    %472 = vmatpush1.msra.mxu0 0.0
    %473 = vmatprep.subr.mxu0 0.0
    %474 = vmatpush1.msra.mxu0 0.0
    %475 = vmatprep.subr.mxu0 0.0
    %476 = vmatpush1.msra.mxu0 0.0
    %477 = vmatprep.subr.mxu0 0.0
    %478 = vmatpush1.msra.mxu0 0.0
    %479 = vmatprep.subr.mxu0 0.0
    %480 = vmatpush1.msra.mxu0 0.0
    %481 = vmatprep.subr.mxu0 0.0
    %482 = vmatpush1.msra.mxu0 0.0
    %483 = vmatprep.subr.mxu0 0.0
    %484 = vmatpush1.msra.mxu0 0.0
    %485 = vmatprep.subr.mxu0 0.0
    %486 = vmatpush1.msra.mxu0 0.0
    %487 = vmatprep.mubr.f32.mxu0 0.0
    %488 = vmatmul.mubr.f32.gmra.mrb[0].mxu0 %v80
    %v489 = vpop.f32.mrb[0].mxu0
    %v490 = vadd.f32 %v262, %v489
    %v491 = vpop.f32.mrb[0].mxu0
    %492 = vdwg.mxu0
    %v493 = vld [vmem:[%s6] sm:$0x1]
    %v494 = vlaneseq
    %v495 = vshrl.u32 %v494, 7
    %v496 = vsub.s32 0, %v495
    %v497 = vrot.slane %v493, %v496
    %v498 = vadd.f32 %v490, %v497
    %v499 = vld [vmem:[%s6 + $0x5] sm:$0x1]
    %v500 = vld [vmem:[%s6 + $0xa] sm:$0x1]
    %501 = vrot.lane.b32.xlu0 %v498, 64
    %v502 = vpop.permute.xlu0 %501
    %v503 = vsub.f32 %v498, %v502
    %v504 = vmul.f32 %v503, 0.5
    %v505 = vmul.f32 %v504, %v504
    %v506 = vadd.f32 %v505, 1e-05
    %v507 = vrsqrt.pop %v506
    %v508 = vmul.f32 %v504, %v507
    %v509 = vlaneseq
    %v510 = vshrl.u32 %v509, 7
    %v511 = vsub.s32 0, %v510
    %v512 = vrot.slane %v499, %v511
    %v513 = vmul.f32 %v508, %v512
    %v514 = vlaneseq
    %v515 = vshrl.u32 %v514, 7
    %v516 = vsub.s32 0, %v515
    %v517 = vrot.slane %v500, %v516
    %v518 = vadd.f32 %v513, %v517
    %v519 = vxor.u32 %v518, 2147483648
    %v520 = vmul.f32 %v519, 1.442695
    %v521 = vpow.pop %v520
    %v522 = vadd.f32 %v521, 1.0
    %v523 = vrcp.pop %v522
    %v524 = vmul.f32 1.0, %v523
    %v525 = vmul.f32 %v518, %v524
    %s526 = scalar_lea.vmem [#allocation8], 128
    %v527 = vld [vmem:[%s526] sm:$0xff]
    %v528 = vld [vmem:[%s526 + $0x8] sm:$0xff]
    %v529 = vld [vmem:[%s526 + $0x10] sm:$0xff]
    %v530 = vld [vmem:[%s526 + $0x18] sm:$0xff]
    %v531 = vld [vmem:[%s526 + $0x20] sm:$0xff]
    %v532 = vld [vmem:[%s526 + $0x28] sm:$0xff]
    %v533 = vld [vmem:[%s526 + $0x30] sm:$0xff]
    %v534 = vld [vmem:[%s526 + $0x38] sm:$0xff]
    %v535 = vld [vmem:[%s526 + $0x40] sm:$0xff]
    %v536 = vld [vmem:[%s526 + $0x48] sm:$0xff]
    %v537 = vld [vmem:[%s526 + $0x50] sm:$0xff]
    %v538 = vld [vmem:[%s526 + $0x58] sm:$0xff]
    %v539 = vld [vmem:[%s526 + $0x60] sm:$0xff]
    %v540 = vld [vmem:[%s526 + $0x68] sm:$0xff]
    %v541 = vld [vmem:[%s526 + $0x70] sm:$0xff]
    %v542 = vld [vmem:[%s526 + $0x78] sm:$0xff]
    %543 = vmatprep.subr.mxu0 0.0
    %544 = vmatpush1.msra.mxu0 %v527
    %545 = vmatprep.subr.mxu0 0.0
    %546 = vmatpush1.msra.mxu0 %v528
    %547 = vmatprep.subr.mxu0 0.0
    %548 = vmatpush1.msra.mxu0 %v529
    %549 = vmatprep.subr.mxu0 0.0
    %550 = vmatpush1.msra.mxu0 %v530
    %551 = vmatprep.subr.mxu0 0.0
    %552 = vmatpush1.msra.mxu0 %v531
    %553 = vmatprep.subr.mxu0 0.0
    %554 = vmatpush1.msra.mxu0 %v532
    %555 = vmatprep.subr.mxu0 0.0
    %556 = vmatpush1.msra.mxu0 %v533
    %557 = vmatprep.subr.mxu0 0.0
    %558 = vmatpush1.msra.mxu0 %v534
    %559 = vmatprep.subr.mxu0 0.0
    %560 = vmatpush1.msra.mxu0 %v535
    %561 = vmatprep.subr.mxu0 0.0
    %562 = vmatpush1.msra.mxu0 %v536
    %563 = vmatprep.subr.mxu0 0.0
    %564 = vmatpush1.msra.mxu0 %v537
    %565 = vmatprep.subr.mxu0 0.0
    %566 = vmatpush1.msra.mxu0 %v538
    %567 = vmatprep.subr.mxu0 0.0
    %568 = vmatpush1.msra.mxu0 %v539
    %569 = vmatprep.subr.mxu0 0.0
    %570 = vmatpush1.msra.mxu0 %v540
    %571 = vmatprep.subr.mxu0 0.0
    %572 = vmatpush1.msra.mxu0 %v541
    %573 = vmatprep.subr.mxu0 0.0
    %574 = vmatpush1.msra.mxu0 %v542
    %575 = vmatprep.subr.mxu0 0.0
    %576 = vmatpush1.msra.mxu0 0.0
    %577 = vmatprep.subr.mxu0 0.0
    %578 = vmatpush1.msra.mxu0 0.0
    %579 = vmatprep.subr.mxu0 0.0
    %580 = vmatpush1.msra.mxu0 0.0
    %581 = vmatprep.subr.mxu0 0.0
    %582 = vmatpush1.msra.mxu0 0.0
    %583 = vmatprep.subr.mxu0 0.0
    %584 = vmatpush1.msra.mxu0 0.0
    %585 = vmatprep.subr.mxu0 0.0
    %586 = vmatpush1.msra.mxu0 0.0
    %587 = vmatprep.subr.mxu0 0.0
    %588 = vmatpush1.msra.mxu0 0.0
    %589 = vmatprep.subr.mxu0 0.0
    %590 = vmatpush1.msra.mxu0 0.0
    %591 = vmatprep.subr.mxu0 0.0
    %592 = vmatpush1.msra.mxu0 0.0
    %593 = vmatprep.subr.mxu0 0.0
    %594 = vmatpush1.msra.mxu0 0.0
    %595 = vmatprep.subr.mxu0 0.0
    %596 = vmatpush1.msra.mxu0 0.0
    %597 = vmatprep.subr.mxu0 0.0
    %598 = vmatpush1.msra.mxu0 0.0
    %599 = vmatprep.subr.mxu0 0.0
    %600 = vmatpush1.msra.mxu0 0.0
    %601 = vmatprep.subr.mxu0 0.0
    %602 = vmatpush1.msra.mxu0 0.0
    %603 = vmatprep.subr.mxu0 0.0
    %604 = vmatpush1.msra.mxu0 0.0
    %605 = vmatprep.subr.mxu0 0.0
    %606 = vmatpush1.msra.mxu0 0.0
    %607 = vmatprep.mubr.f32.mxu0 0.0
    %608 = vmatmul.mubr.f32.gmra.mrb[0].mxu0 %v525
    %v609 = vpop.f32.mrb[0].mxu0
    %v610 = vadd.f32 %v264, %v609
    %v611 = vpop.f32.mrb[0].mxu0
    %612 = vdwg.mxu0
    %v613 = vld [vmem:[%s6 + $0x1] sm:$0x1]
    %v614 = vlaneseq
    %v615 = vshrl.u32 %v614, 7
    %v616 = vsub.s32 0, %v615
    %v617 = vrot.slane %v613, %v616
    %v618 = vadd.f32 %v610, %v617
    %v619 = vld [vmem:[%s6 + $0x6] sm:$0x1]
    %v620 = vld [vmem:[%s6 + $0xb] sm:$0x1]
    %621 = vrot.lane.b32.xlu0 %v618, 64
    %v622 = vpop.permute.xlu0 %621
    %v623 = vsub.f32 %v618, %v622
    %v624 = vmul.f32 %v623, 0.5
    %v625 = vmul.f32 %v624, %v624
    %v626 = vadd.f32 %v625, 1e-05
    %v627 = vrsqrt.pop %v626
    %v628 = vmul.f32 %v624, %v627
    %v629 = vlaneseq
    %v630 = vshrl.u32 %v629, 7
    %v631 = vsub.s32 0, %v630
    %v632 = vrot.slane %v619, %v631
    %v633 = vmul.f32 %v628, %v632
    %v634 = vlaneseq
    %v635 = vshrl.u32 %v634, 7
    %v636 = vsub.s32 0, %v635
    %v637 = vrot.slane %v620, %v636
    %v638 = vadd.f32 %v633, %v637
    %v639 = vxor.u32 %v638, 2147483648
    %v640 = vmul.f32 %v639, 1.442695
    %v641 = vpow.pop %v640
    %v642 = vadd.f32 %v641, 1.0
    %v643 = vrcp.pop %v642
    %v644 = vmul.f32 1.0, %v643
    %v645 = vmul.f32 %v638, %v644
    %s646 = scalar_lea.vmem [#allocation8], 256
    %v647 = vld [vmem:[%s646] sm:$0xff]
    %v648 = vld [vmem:[%s646 + $0x8] sm:$0xff]
    %v649 = vld [vmem:[%s646 + $0x10] sm:$0xff]
    %v650 = vld [vmem:[%s646 + $0x18] sm:$0xff]
    %v651 = vld [vmem:[%s646 + $0x20] sm:$0xff]
    %v652 = vld [vmem:[%s646 + $0x28] sm:$0xff]
    %v653 = vld [vmem:[%s646 + $0x30] sm:$0xff]
    %v654 = vld [vmem:[%s646 + $0x38] sm:$0xff]
    %v655 = vld [vmem:[%s646 + $0x40] sm:$0xff]
    %v656 = vld [vmem:[%s646 + $0x48] sm:$0xff]
    %v657 = vld [vmem:[%s646 + $0x50] sm:$0xff]
    %v658 = vld [vmem:[%s646 + $0x58] sm:$0xff]
    %v659 = vld [vmem:[%s646 + $0x60] sm:$0xff]
    %v660 = vld [vmem:[%s646 + $0x68] sm:$0xff]
    %v661 = vld [vmem:[%s646 + $0x70] sm:$0xff]
    %v662 = vld [vmem:[%s646 + $0x78] sm:$0xff]
    %663 = vmatprep.subr.mxu0 0.0
    %664 = vmatpush1.msra.mxu0 %v647
    %665 = vmatprep.subr.mxu0 0.0
    %666 = vmatpush1.msra.mxu0 %v648
    %667 = vmatprep.subr.mxu0 0.0
    %668 = vmatpush1.msra.mxu0 %v649
    %669 = vmatprep.subr.mxu0 0.0
    %670 = vmatpush1.msra.mxu0 %v650
    %671 = vmatprep.subr.mxu0 0.0
    %672 = vmatpush1.msra.mxu0 %v651
    %673 = vmatprep.subr.mxu0 0.0
    %674 = vmatpush1.msra.mxu0 %v652
    %675 = vmatprep.subr.mxu0 0.0
    %676 = vmatpush1.msra.mxu0 %v653
    %677 = vmatprep.subr.mxu0 0.0
    %678 = vmatpush1.msra.mxu0 %v654
    %679 = vmatprep.subr.mxu0 0.0
    %680 = vmatpush1.msra.mxu0 %v655
    %681 = vmatprep.subr.mxu0 0.0
    %682 = vmatpush1.msra.mxu0 %v656
    %683 = vmatprep.subr.mxu0 0.0
    %684 = vmatpush1.msra.mxu0 %v657
    %685 = vmatprep.subr.mxu0 0.0
    %686 = vmatpush1.msra.mxu0 %v658
    %687 = vmatprep.subr.mxu0 0.0
    %688 = vmatpush1.msra.mxu0 %v659
    %689 = vmatprep.subr.mxu0 0.0
    %690 = vmatpush1.msra.mxu0 %v660
    %691 = vmatprep.subr.mxu0 0.0
    %692 = vmatpush1.msra.mxu0 %v661
    %693 = vmatprep.subr.mxu0 0.0
    %694 = vmatpush1.msra.mxu0 %v662
    %695 = vmatprep.subr.mxu0 0.0
    %696 = vmatpush1.msra.mxu0 0.0
    %697 = vmatprep.subr.mxu0 0.0
    %698 = vmatpush1.msra.mxu0 0.0
    %699 = vmatprep.subr.mxu0 0.0
    %700 = vmatpush1.msra.mxu0 0.0
    %701 = vmatprep.subr.mxu0 0.0
    %702 = vmatpush1.msra.mxu0 0.0
    %703 = vmatprep.subr.mxu0 0.0
    %704 = vmatpush1.msra.mxu0 0.0
    %705 = vmatprep.subr.mxu0 0.0
    %706 = vmatpush1.msra.mxu0 0.0
    %707 = vmatprep.subr.mxu0 0.0
    %708 = vmatpush1.msra.mxu0 0.0
    %709 = vmatprep.subr.mxu0 0.0
    %710 = vmatpush1.msra.mxu0 0.0
    %711 = vmatprep.subr.mxu0 0.0
    %712 = vmatpush1.msra.mxu0 0.0
    %713 = vmatprep.subr.mxu0 0.0
    %714 = vmatpush1.msra.mxu0 0.0
    %715 = vmatprep.subr.mxu0 0.0
    %716 = vmatpush1.msra.mxu0 0.0
    %717 = vmatprep.subr.mxu0 0.0
    %718 = vmatpush1.msra.mxu0 0.0
    %719 = vmatprep.subr.mxu0 0.0
    %720 = vmatpush1.msra.mxu0 0.0
    %721 = vmatprep.subr.mxu0 0.0
    %722 = vmatpush1.msra.mxu0 0.0
    %723 = vmatprep.subr.mxu0 0.0
    %724 = vmatpush1.msra.mxu0 0.0
    %725 = vmatprep.subr.mxu0 0.0
    %726 = vmatpush1.msra.mxu0 0.0
    %727 = vmatprep.mubr.f32.mxu0 0.0
    %728 = vmatmul.mubr.f32.gmra.mrb[0].mxu0 %v645
    %v729 = vpop.f32.mrb[0].mxu0
    %v730 = vadd.f32 %v333, %v729
    %v731 = vpop.f32.mrb[0].mxu0
    %732 = vdwg.mxu0
    %v733 = vld [vmem:[%s6 + $0x2] sm:$0x1]
    %v734 = vlaneseq
    %v735 = vshrl.u32 %v734, 7
    %v736 = vsub.s32 0, %v735
    %v737 = vrot.slane %v733, %v736
    %v738 = vadd.f32 %v730, %v737
    %v739 = vld [vmem:[%s6 + $0x7] sm:$0x1]
    %v740 = vld [vmem:[%s6 + $0xc] sm:$0x1]
    %741 = vrot.lane.b32.xlu0 %v738, 64
    %v742 = vpop.permute.xlu0 %741
    %v743 = vsub.f32 %v738, %v742
    %v744 = vmul.f32 %v743, 0.5
    %v745 = vmul.f32 %v744, %v744
    %v746 = vadd.f32 %v745, 1e-05
    %v747 = vrsqrt.pop %v746
    %v748 = vmul.f32 %v744, %v747
    %v749 = vlaneseq
    %v750 = vshrl.u32 %v749, 7
    %v751 = vsub.s32 0, %v750
    %v752 = vrot.slane %v739, %v751
    %v753 = vmul.f32 %v748, %v752
    %v754 = vlaneseq
    %v755 = vshrl.u32 %v754, 7
    %v756 = vsub.s32 0, %v755
    %v757 = vrot.slane %v740, %v756
    %v758 = vadd.f32 %v753, %v757
    %v759 = vxor.u32 %v758, 2147483648
    %v760 = vmul.f32 %v759, 1.442695
    %v761 = vpow.pop %v760
    %v762 = vadd.f32 %v761, 1.0
    %v763 = vrcp.pop %v762
    %v764 = vmul.f32 1.0, %v763
    %v765 = vmul.f32 %v758, %v764
    %v766 = vadd.f32 %v525, %v765
    %s767 = scalar_lea.vmem [#allocation8], 384
    %v768 = vld [vmem:[%s767] sm:$0xff]
    %v769 = vld [vmem:[%s767 + $0x8] sm:$0xff]
    %v770 = vld [vmem:[%s767 + $0x10] sm:$0xff]
    %v771 = vld [vmem:[%s767 + $0x18] sm:$0xff]
    %v772 = vld [vmem:[%s767 + $0x20] sm:$0xff]
    %v773 = vld [vmem:[%s767 + $0x28] sm:$0xff]
    %v774 = vld [vmem:[%s767 + $0x30] sm:$0xff]
    %v775 = vld [vmem:[%s767 + $0x38] sm:$0xff]
    %v776 = vld [vmem:[%s767 + $0x40] sm:$0xff]
    %v777 = vld [vmem:[%s767 + $0x48] sm:$0xff]
    %v778 = vld [vmem:[%s767 + $0x50] sm:$0xff]
    %v779 = vld [vmem:[%s767 + $0x58] sm:$0xff]
    %v780 = vld [vmem:[%s767 + $0x60] sm:$0xff]
    %v781 = vld [vmem:[%s767 + $0x68] sm:$0xff]
    %v782 = vld [vmem:[%s767 + $0x70] sm:$0xff]
    %v783 = vld [vmem:[%s767 + $0x78] sm:$0xff]
    %784 = vmatprep.subr.mxu0 0.0
    %785 = vmatpush1.msra.mxu0 %v768
    %786 = vmatprep.subr.mxu0 0.0
    %787 = vmatpush1.msra.mxu0 %v769
    %788 = vmatprep.subr.mxu0 0.0
    %789 = vmatpush1.msra.mxu0 %v770
    %790 = vmatprep.subr.mxu0 0.0
    %791 = vmatpush1.msra.mxu0 %v771
    %792 = vmatprep.subr.mxu0 0.0
    %793 = vmatpush1.msra.mxu0 %v772
    %794 = vmatprep.subr.mxu0 0.0
    %795 = vmatpush1.msra.mxu0 %v773
    %796 = vmatprep.subr.mxu0 0.0
    %797 = vmatpush1.msra.mxu0 %v774
    %798 = vmatprep.subr.mxu0 0.0
    %799 = vmatpush1.msra.mxu0 %v775
    %800 = vmatprep.subr.mxu0 0.0
    %801 = vmatpush1.msra.mxu0 %v776
    %802 = vmatprep.subr.mxu0 0.0
    %803 = vmatpush1.msra.mxu0 %v777
    %804 = vmatprep.subr.mxu0 0.0
    %805 = vmatpush1.msra.mxu0 %v778
    %806 = vmatprep.subr.mxu0 0.0
    %807 = vmatpush1.msra.mxu0 %v779
    %808 = vmatprep.subr.mxu0 0.0
    %809 = vmatpush1.msra.mxu0 %v780
    %810 = vmatprep.subr.mxu0 0.0
    %811 = vmatpush1.msra.mxu0 %v781
    %812 = vmatprep.subr.mxu0 0.0
    %813 = vmatpush1.msra.mxu0 %v782
    %814 = vmatprep.subr.mxu0 0.0
    %815 = vmatpush1.msra.mxu0 %v783
    %816 = vmatprep.subr.mxu0 0.0
    %817 = vmatpush1.msra.mxu0 0.0
    %818 = vmatprep.subr.mxu0 0.0
    %819 = vmatpush1.msra.mxu0 0.0
    %820 = vmatprep.subr.mxu0 0.0
    %821 = vmatpush1.msra.mxu0 0.0
    %822 = vmatprep.subr.mxu0 0.0
    %823 = vmatpush1.msra.mxu0 0.0
    %824 = vmatprep.subr.mxu0 0.0
    %825 = vmatpush1.msra.mxu0 0.0
    %826 = vmatprep.subr.mxu0 0.0
    %827 = vmatpush1.msra.mxu0 0.0
    %828 = vmatprep.subr.mxu0 0.0
    %829 = vmatpush1.msra.mxu0 0.0
    %830 = vmatprep.subr.mxu0 0.0
    %831 = vmatpush1.msra.mxu0 0.0
    %832 = vmatprep.subr.mxu0 0.0
    %833 = vmatpush1.msra.mxu0 0.0
    %834 = vmatprep.subr.mxu0 0.0
    %835 = vmatpush1.msra.mxu0 0.0
    %836 = vmatprep.subr.mxu0 0.0
    %837 = vmatpush1.msra.mxu0 0.0
    %838 = vmatprep.subr.mxu0 0.0
    %839 = vmatpush1.msra.mxu0 0.0
    %840 = vmatprep.subr.mxu0 0.0
    %841 = vmatpush1.msra.mxu0 0.0
    %842 = vmatprep.subr.mxu0 0.0
    %843 = vmatpush1.msra.mxu0 0.0
    %844 = vmatprep.subr.mxu0 0.0
    %845 = vmatpush1.msra.mxu0 0.0
    %846 = vmatprep.subr.mxu0 0.0
    %847 = vmatpush1.msra.mxu0 0.0
    %848 = vmatprep.mubr.f32.mxu0 0.0
    %849 = vmatmul.mubr.f32.gmra.mrb[0].mxu0 %v766
    %v850 = vpop.f32.mrb[0].mxu0
    %v851 = vadd.f32 %v335, %v850
    %v852 = vpop.f32.mrb[0].mxu0
    %853 = vdwg.mxu0
    %v854 = vld [vmem:[%s6 + $0x3] sm:$0x1]
    %v855 = vlaneseq
    %v856 = vshrl.u32 %v855, 7
    %v857 = vsub.s32 0, %v856
    %v858 = vrot.slane %v854, %v857
    %v859 = vadd.f32 %v851, %v858
    %v860 = vld [vmem:[%s6 + $0x8] sm:$0x1]
    %v861 = vld [vmem:[%s6 + $0xd] sm:$0x1]
    %862 = vrot.lane.b32.xlu0 %v859, 64
    %v863 = vpop.permute.xlu0 %862
    %v864 = vsub.f32 %v859, %v863
    %v865 = vmul.f32 %v864, 0.5
    %v866 = vmul.f32 %v865, %v865
    %v867 = vadd.f32 %v866, 1e-05
    %v868 = vrsqrt.pop %v867
    %v869 = vmul.f32 %v865, %v868
    %v870 = vlaneseq
    %v871 = vshrl.u32 %v870, 7
    %v872 = vsub.s32 0, %v871
    %v873 = vrot.slane %v860, %v872
    %v874 = vmul.f32 %v869, %v873
    %v875 = vlaneseq
    %v876 = vshrl.u32 %v875, 7
    %v877 = vsub.s32 0, %v876
    %v878 = vrot.slane %v861, %v877
    %v879 = vadd.f32 %v874, %v878
    %v880 = vxor.u32 %v879, 2147483648
    %v881 = vmul.f32 %v880, 1.442695
    %v882 = vpow.pop %v881
    %v883 = vadd.f32 %v882, 1.0
    %v884 = vrcp.pop %v883
    %v885 = vmul.f32 1.0, %v884
    %v886 = vmul.f32 %v879, %v885
    %s887 = scalar_lea.vmem [#allocation8], 512
    %v888 = vld [vmem:[%s887] sm:$0xff]
    %v889 = vld [vmem:[%s887 + $0x8] sm:$0xff]
    %v890 = vld [vmem:[%s887 + $0x10] sm:$0xff]
    %v891 = vld [vmem:[%s887 + $0x18] sm:$0xff]
    %v892 = vld [vmem:[%s887 + $0x20] sm:$0xff]
    %v893 = vld [vmem:[%s887 + $0x28] sm:$0xff]
    %v894 = vld [vmem:[%s887 + $0x30] sm:$0xff]
    %v895 = vld [vmem:[%s887 + $0x38] sm:$0xff]
    %v896 = vld [vmem:[%s887 + $0x40] sm:$0xff]
    %v897 = vld [vmem:[%s887 + $0x48] sm:$0xff]
    %v898 = vld [vmem:[%s887 + $0x50] sm:$0xff]
    %v899 = vld [vmem:[%s887 + $0x58] sm:$0xff]
    %v900 = vld [vmem:[%s887 + $0x60] sm:$0xff]
    %v901 = vld [vmem:[%s887 + $0x68] sm:$0xff]
    %v902 = vld [vmem:[%s887 + $0x70] sm:$0xff]
    %v903 = vld [vmem:[%s887 + $0x78] sm:$0xff]
    %904 = vmatprep.subr.mxu0 0.0
    %905 = vmatpush1.msra.mxu0 %v888
    %906 = vmatprep.subr.mxu0 0.0
    %907 = vmatpush1.msra.mxu0 %v889
    %908 = vmatprep.subr.mxu0 0.0
    %909 = vmatpush1.msra.mxu0 %v890
    %910 = vmatprep.subr.mxu0 0.0
    %911 = vmatpush1.msra.mxu0 %v891
    %912 = vmatprep.subr.mxu0 0.0
    %913 = vmatpush1.msra.mxu0 %v892
    %914 = vmatprep.subr.mxu0 0.0
    %915 = vmatpush1.msra.mxu0 %v893
    %916 = vmatprep.subr.mxu0 0.0
    %917 = vmatpush1.msra.mxu0 %v894
    %918 = vmatprep.subr.mxu0 0.0
    %919 = vmatpush1.msra.mxu0 %v895
    %920 = vmatprep.subr.mxu0 0.0
    %921 = vmatpush1.msra.mxu0 %v896
    %922 = vmatprep.subr.mxu0 0.0
    %923 = vmatpush1.msra.mxu0 %v897
    %924 = vmatprep.subr.mxu0 0.0
    %925 = vmatpush1.msra.mxu0 %v898
    %926 = vmatprep.subr.mxu0 0.0
    %927 = vmatpush1.msra.mxu0 %v899
    %928 = vmatprep.subr.mxu0 0.0
    %929 = vmatpush1.msra.mxu0 %v900
    %930 = vmatprep.subr.mxu0 0.0
    %931 = vmatpush1.msra.mxu0 %v901
    %932 = vmatprep.subr.mxu0 0.0
    %933 = vmatpush1.msra.mxu0 %v902
    %934 = vmatprep.subr.mxu0 0.0
    %935 = vmatpush1.msra.mxu0 %v903
    %936 = vmatprep.subr.mxu0 0.0
    %937 = vmatpush1.msra.mxu0 0.0
    %938 = vmatprep.subr.mxu0 0.0
    %939 = vmatpush1.msra.mxu0 0.0
    %940 = vmatprep.subr.mxu0 0.0
    %941 = vmatpush1.msra.mxu0 0.0
    %942 = vmatprep.subr.mxu0 0.0
    %943 = vmatpush1.msra.mxu0 0.0
    %944 = vmatprep.subr.mxu0 0.0
    %945 = vmatpush1.msra.mxu0 0.0
    %946 = vmatprep.subr.mxu0 0.0
    %947 = vmatpush1.msra.mxu0 0.0
    %948 = vmatprep.subr.mxu0 0.0
    %949 = vmatpush1.msra.mxu0 0.0
    %950 = vmatprep.subr.mxu0 0.0
    %951 = vmatpush1.msra.mxu0 0.0
    %952 = vmatprep.subr.mxu0 0.0
    %953 = vmatpush1.msra.mxu0 0.0
    %954 = vmatprep.subr.mxu0 0.0
    %955 = vmatpush1.msra.mxu0 0.0
    %956 = vmatprep.subr.mxu0 0.0
    %957 = vmatpush1.msra.mxu0 0.0
    %958 = vmatprep.subr.mxu0 0.0
    %959 = vmatpush1.msra.mxu0 0.0
    %960 = vmatprep.subr.mxu0 0.0
    %961 = vmatpush1.msra.mxu0 0.0
    %962 = vmatprep.subr.mxu0 0.0
    %963 = vmatpush1.msra.mxu0 0.0
    %964 = vmatprep.subr.mxu0 0.0
    %965 = vmatpush1.msra.mxu0 0.0
    %966 = vmatprep.subr.mxu0 0.0
    %967 = vmatpush1.msra.mxu0 0.0
    %968 = vmatprep.mubr.f32.mxu0 0.0
    %969 = vmatmul.mubr.f32.gmra.mrb[0].mxu0 %v886
    %v970 = vpop.f32.mrb[0].mxu0
    %v971 = vadd.f32 %v404, %v970
    %v972 = vpop.f32.mrb[0].mxu0
    %973 = vdwg.mxu0
    %v974 = vld [vmem:[%s6 + $0x4] sm:$0x1]
    %v975 = vlaneseq
    %v976 = vshrl.u32 %v975, 7
    %v977 = vsub.s32 0, %v976
    %v978 = vrot.slane %v974, %v977
    %v979 = vadd.f32 %v971, %v978
    %v980 = vld [vmem:[%s6 + $0x9] sm:$0x1]
    %v981 = vld [vmem:[%s6 + $0xe] sm:$0x1]
    %982 = vrot.lane.b32.xlu0 %v979, 64
    %v983 = vpop.permute.xlu0 %982
    %v984 = vsub.f32 %v979, %v983
    %v985 = vmul.f32 %v984, 0.5
    %v986 = vmul.f32 %v985, %v985
    %v987 = vadd.f32 %v986, 1e-05
    %v988 = vrsqrt.pop %v987
    %v989 = vmul.f32 %v985, %v988
    %v990 = vlaneseq
    %v991 = vshrl.u32 %v990, 7
    %v992 = vsub.s32 0, %v991
    %v993 = vrot.slane %v980, %v992
    %v994 = vmul.f32 %v989, %v993
    %v995 = vlaneseq
    %v996 = vshrl.u32 %v995, 7
    %v997 = vsub.s32 0, %v996
    %v998 = vrot.slane %v981, %v997
    %v999 = vadd.f32 %v994, %v998
    %v1000 = vxor.u32 %v999, 2147483648
    %v1001 = vmul.f32 %v1000, 1.442695
    %v1002 = vpow.pop %v1001
    %v1003 = vadd.f32 %v1002, 1.0
    %v1004 = vrcp.pop %v1003
    %v1005 = vmul.f32 1.0, %v1004
    %v1006 = vmul.f32 %v999, %v1005
    %v1007 = vadd.f32 %v766, %v1006
    %s1008 = scalar_lea.vmem [#allocation8], 640
    %v1009 = vld [vmem:[%s1008] sm:$0xff]
    %v1010 = vld [vmem:[%s1008 + $0x8] sm:$0xff]
    %v1011 = vld [vmem:[%s1008 + $0x10] sm:$0xff]
    %v1012 = vld [vmem:[%s1008 + $0x18] sm:$0xff]
    %v1013 = vld [vmem:[%s1008 + $0x20] sm:$0xff]
    %v1014 = vld [vmem:[%s1008 + $0x28] sm:$0xff]
    %v1015 = vld [vmem:[%s1008 + $0x30] sm:$0xff]
    %v1016 = vld [vmem:[%s1008 + $0x38] sm:$0xff]
    %v1017 = vld [vmem:[%s1008 + $0x40] sm:$0xff]
    %v1018 = vld [vmem:[%s1008 + $0x48] sm:$0xff]
    %v1019 = vld [vmem:[%s1008 + $0x50] sm:$0xff]
    %v1020 = vld [vmem:[%s1008 + $0x58] sm:$0xff]
    %v1021 = vld [vmem:[%s1008 + $0x60] sm:$0xff]
    %v1022 = vld [vmem:[%s1008 + $0x68] sm:$0xff]
    %v1023 = vld [vmem:[%s1008 + $0x70] sm:$0xff]
    %v1024 = vld [vmem:[%s1008 + $0x78] sm:$0xff]
    %v1025 = vld [vmem:[%s6 + $0x10] sm:$0x1]
    %v1026 = vlaneseq
    %v1027 = vshrl.u32 %v1026, 7
    %v1028 = vsub.s32 0, %v1027
    %v1029 = vrot.slane %v1025, %v1028
    %1030 = vmatprep.subr.mxu0 0.0
    %1031 = vmatpush1.msra.mxu0 %v1009
    %1032 = vmatprep.subr.mxu0 0.0
    %1033 = vmatpush1.msra.mxu0 %v1010
    %1034 = vmatprep.subr.mxu0 0.0
    %1035 = vmatpush1.msra.mxu0 %v1011
    %1036 = vmatprep.subr.mxu0 0.0
    %1037 = vmatpush1.msra.mxu0 %v1012
    %1038 = vmatprep.subr.mxu0 0.0
    %1039 = vmatpush1.msra.mxu0 %v1013
    %1040 = vmatprep.subr.mxu0 0.0
    %1041 = vmatpush1.msra.mxu0 %v1014
    %1042 = vmatprep.subr.mxu0 0.0
    %1043 = vmatpush1.msra.mxu0 %v1015
    %1044 = vmatprep.subr.mxu0 0.0
    %1045 = vmatpush1.msra.mxu0 %v1016
    %1046 = vmatprep.subr.mxu0 0.0
    %1047 = vmatpush1.msra.mxu0 %v1017
    %1048 = vmatprep.subr.mxu0 0.0
    %1049 = vmatpush1.msra.mxu0 %v1018
    %1050 = vmatprep.subr.mxu0 0.0
    %1051 = vmatpush1.msra.mxu0 %v1019
    %1052 = vmatprep.subr.mxu0 0.0
    %1053 = vmatpush1.msra.mxu0 %v1020
    %1054 = vmatprep.subr.mxu0 0.0
    %1055 = vmatpush1.msra.mxu0 %v1021
    %1056 = vmatprep.subr.mxu0 0.0
    %1057 = vmatpush1.msra.mxu0 %v1022
    %1058 = vmatprep.subr.mxu0 0.0
    %1059 = vmatpush1.msra.mxu0 %v1023
    %1060 = vmatprep.subr.mxu0 0.0
    %1061 = vmatpush1.msra.mxu0 %v1024
    %1062 = vmatprep.subr.mxu0 0.0
    %1063 = vmatpush1.msra.mxu0 0.0
    %1064 = vmatprep.subr.mxu0 0.0
    %1065 = vmatpush1.msra.mxu0 0.0
    %1066 = vmatprep.subr.mxu0 0.0
    %1067 = vmatpush1.msra.mxu0 0.0
    %1068 = vmatprep.subr.mxu0 0.0
    %1069 = vmatpush1.msra.mxu0 0.0
    %1070 = vmatprep.subr.mxu0 0.0
    %1071 = vmatpush1.msra.mxu0 0.0
    %1072 = vmatprep.subr.mxu0 0.0
    %1073 = vmatpush1.msra.mxu0 0.0
    %1074 = vmatprep.subr.mxu0 0.0
    %1075 = vmatpush1.msra.mxu0 0.0
    %1076 = vmatprep.subr.mxu0 0.0
    %1077 = vmatpush1.msra.mxu0 0.0
    %1078 = vmatprep.subr.mxu0 0.0
    %1079 = vmatpush1.msra.mxu0 0.0
    %1080 = vmatprep.subr.mxu0 0.0
    %1081 = vmatpush1.msra.mxu0 0.0
    %1082 = vmatprep.subr.mxu0 0.0
    %1083 = vmatpush1.msra.mxu0 0.0
    %1084 = vmatprep.subr.mxu0 0.0
    %1085 = vmatpush1.msra.mxu0 0.0
    %1086 = vmatprep.subr.mxu0 0.0
    %1087 = vmatpush1.msra.mxu0 0.0
    %1088 = vmatprep.subr.mxu0 0.0
    %1089 = vmatpush1.msra.mxu0 0.0
    %1090 = vmatprep.subr.mxu0 0.0
    %1091 = vmatpush1.msra.mxu0 0.0
    %1092 = vmatprep.subr.mxu0 0.0
    %1093 = vmatpush1.msra.mxu0 0.0
    %1094 = vmatprep.mubr.f32.mxu0 0.0
    %1095 = vmatmul.mubr.f32.gmra.mrb[0].mxu0 %v1007
    %v1096 = vpop.f32.mrb[0].mxu0
    %v1097 = vadd.f32 %v1029, %v1096
    %v1098 = vpop.f32.mrb[0].mxu0
    %1099 = vdwg.mxu0
    %v1100 = vld [vmem:[%s2] sm:$0x3]
    %v1101 = vrcp.pop %v1100
    %1103 = vset.pattern.permute.xlu0 0
    %1104 = vperm.xlu0 %1103, %v1101
    %v1105 = vpop.permute.xlu0 %1104
    %v1107 = vmul.f32 %v1097, %v1105
    %1108 = vst [vmem:[#allocation10] sm:$0x3] %v1107
    // Predicated region
    $region46: #{tpu_custom_call.1} parent=1 // pred_check
      _
    $region47: #{tpu_custom_call.1} parent=1 // pred_check_branch
      %1110 = sbr.rel (0) target = $region49
    $region48: #{tpu_custom_call.1} parent=1 // pred_region
      %s1112 = ssub.s32 32, 32
      %1113 = vsyncadd [#allocation4], %s1112
      %s1115 = sshll.u32 [#allocation10], 4
      %s1116 = int_to_ptr.vmem [resolvable:$true] %s1115
      %1118 = dma.vmem_to_hbm [thread:$0]  %s1116, 32, %s7, [#allocation4]
    $region49: #{tpu_custom_call.1} parent=1 // pred_fallthru
      _
    // Predicated region
    $region50: #{tpu_custom_call.1} parent=1 // pred_check
      _
    $region51: #{tpu_custom_call.1} parent=1 // pred_check_branch
      %1120 = sbr.rel (0) target = $region53
    $region52: #{tpu_custom_call.1} parent=1 // pred_region
      %1121 = dma.done [#allocation4], 32
    $region53: #{tpu_custom_call.1} parent=1 // pred_fallthru
      _
    %1122 = vsyncpa [#allocation3], 1
    %1123 = vsyncpa [#allocation6], 1
    %1124 = vsyncpa [#allocation9], 1
    %1125 = vsyncpa [#allocation4], 1

</llo_original>
